<compile_context>
chip_gen: v5e
topology: v5e:2x2
jax: 0.10.0
libtpu: 0.0.40
codegen_flags: <defaults>
</compile_context>

<pallas_src>
import math

import numpy as np
import jax
import jax.numpy as jnp
from jax.experimental import pallas as pl
from jax.experimental.pallas import tpu as pltpu


def _sigmoid(x):
    # exp -> EUP, approx reciprocal -> EUP; keeps the VPU slots free.
    return pl.reciprocal(1.0 + jnp.exp(-x), approx=True)


# ----------------------------------------------------------------------------
# Fused EFF kernel: one grid step per batch image, channel-major (C, H*W).
# ----------------------------------------------------------------------------
def eff_kernel(x_ref, s_ref, wg_ref, bg_ref, wx_ref, bx_ref,
               wpsi_ref, bpsi_ref, band_ref, msa_ref, out_ref):
    x = x_ref[0]                                   # (C,  HW)  "g" input
    s = s_ref[0]                                   # (C,  HW)  skip

    # --- Efficient_Attention_Gate: two grouped 1x1 convs (BN folded) ---
    g1 = jnp.maximum(
        jnp.dot(wg_ref[...], x, preferred_element_type=jnp.float32)
        + bg_ref[...], 0.0)                        # (Cint, HW)
    x1 = jnp.maximum(
        jnp.dot(wx_ref[...], s, preferred_element_type=jnp.float32)
        + bx_ref[...], 0.0)                        # (Cint, HW)
    t = jnp.maximum(g1 + x1, 0.0)                  # relu(g1 + x1)
    psi_logit = jnp.dot(wpsi_ref[...], t,
                        preferred_element_type=jnp.float32) + bpsi_ref[...]
    psi = _sigmoid(psi_logit)                      # (1, HW)
    eag = s * (psi + 1.0)                          # skip*psi + skip

    # --- channel concat (EAG output first, then x) ---
    cat = jnp.concatenate([eag, x], axis=0)        # (2C, HW)

    # --- EfficientChannelAttention: avgpool + banded 1-D conv + sigmoid ---
    # mean_pixels(Band @ cat) == Band @ mean_pixels(cat); matmul keeps the
    # reduction lane-dense on the MXU, mean is one cross-lane XLU reduce.
    bc = jnp.dot(band_ref[...], cat, preferred_element_type=jnp.float32)
    attn = _sigmoid(jnp.mean(bc, axis=1, keepdims=True))    # (2C, 1)
    x2 = cat * attn                                # (2C, HW)

    # --- SpatialAttention: channel mean/max + 7x7 conv (Toeplitz matmul) ---
    avg = jnp.mean(x2, axis=0, keepdims=True)      # (1, HW)
    mx = jnp.max(x2, axis=0, keepdims=True)        # (1, HW)
    stats = jnp.concatenate([avg, mx], axis=1)     # (1, 2*HW)
    sa = _sigmoid(jnp.dot(stats, msa_ref[...],
                          preferred_element_type=jnp.float32))   # (1, HW)

    out_ref[0] = x2 * sa                           # (2C, HW) lane-dense store


def eff_forward(x_nchw, skip_nchw, params):
    N, C, H, W = x_nchw.shape
    HW = H * W
    Cint = params['wg_k'].shape[0]
    C2 = 2 * C

    # NCHW -> (N, C, H*W) is a free reshape (no transpose, no data movement).
    x = x_nchw.reshape(N, C, HW)
    s = skip_nchw.reshape(N, C, HW)

    blk = lambda n: (n, 0, 0)
    fix = lambda n: (0, 0)

    out = pl.pallas_call(
        eff_kernel,
        out_shape=jax.ShapeDtypeStruct((N, C2, HW), jnp.float32),
        grid=(N,),
        in_specs=[
            pl.BlockSpec((1, C, HW), blk),            # x
            pl.BlockSpec((1, C, HW), blk),            # skip
            pl.BlockSpec((Cint, C), fix),             # EAG grouped conv g (dense)
            pl.BlockSpec((Cint, 1), fix),             # its folded bias
            pl.BlockSpec((Cint, C), fix),             # EAG grouped conv x (dense)
            pl.BlockSpec((Cint, 1), fix),             # its folded bias
            pl.BlockSpec((1, Cint), fix),             # psi weight (row)
            pl.BlockSpec((1, 1), fix),                # psi bias
            pl.BlockSpec((C2, C2), fix),              # ECA banded matrix
            pl.BlockSpec((2 * HW, HW), fix),          # SA 7x7 Toeplitz matrix
        ],
        out_specs=pl.BlockSpec((1, C2, HW), blk),
        compiler_params=pltpu.CompilerParams(
            dimension_semantics=("parallel",)),
    )(x, s, params['wg_k'], params['bg_col'], params['wx_k'], params['bx_col'],
      params['wpsi_row'], params['bpsi11'], params['Band'], params['Msa'])

    return out.reshape(N, C2, H, W)                  # NCHW, free reshape


# ----------------------------------------------------------------------------
# Deterministic parameter initialization (BN folded, eval mode) + packing.
# ----------------------------------------------------------------------------
def init_eff_params(in_dim, out_dim, H, W, num_groups=32, seed=0):
    C, Cint, G = in_dim, out_dim, num_groups
    cin_g, cout_g = C // G, Cint // G
    eps = 1e-5
    ks = list(jax.random.split(jax.random.PRNGKey(seed), 16))

    def nrm(k, shape, sdev=0.3):
        return np.asarray(sdev * jax.random.normal(k, shape), dtype=np.float32)

    def make_grouped(kw, kb, kbn):
        w = nrm(kw, (Cint, cin_g))                       # torch grouped conv w
        b = nrm(kb, (Cint,), 0.1)
        k1, k2, k3, k4 = jax.random.split(kbn, 4)
        gamma = 1.0 + nrm(k1, (Cint,), 0.1)
        beta = nrm(k2, (Cint,), 0.1)
        mean = nrm(k3, (Cint,), 0.1)
        var = np.asarray(jax.random.uniform(k4, (Cint,), minval=0.5, maxval=1.5),
                         np.float32)
        # block-diagonal dense (C, Cint) so the grouped 1x1 conv is a matmul
        Wd = np.zeros((C, Cint), np.float32)
        for g in range(G):
            Wd[g * cin_g:(g + 1) * cin_g, g * cout_g:(g + 1) * cout_g] = \
                w[g * cout_g:(g + 1) * cout_g, :].T
        scale = gamma / np.sqrt(var + eps)
        return Wd * scale[None, :], (b - mean) * scale + beta

    Wg, bg = make_grouped(ks[0], ks[1], ks[2])
    Wx, bx = make_grouped(ks[3], ks[4], ks[5])

    # psi: Conv2d(Cint, 1, 1) + BN(1) + Sigmoid, BN folded
    wpsi = nrm(ks[6], (Cint,))
    bpsi = float(nrm(ks[7], (), 0.1))
    k1, k2, k3, k4 = jax.random.split(ks[8], 4)
    gamma = 1.0 + 0.1 * float(jax.random.normal(k1, ()))
    beta = 0.1 * float(jax.random.normal(k2, ()))
    mean = 0.1 * float(jax.random.normal(k3, ()))
    var = float(jax.random.uniform(k4, (), minval=0.5, maxval=1.5))
    scale = gamma / math.sqrt(var + eps)
    wpsi_eff = (wpsi * scale).astype(np.float32)
    bpsi_eff = np.float32((bpsi - mean) * scale + beta)

    # ECA Conv1d over 2*in_dim channels -> banded (C2, C2) matrix
    C2 = 2 * C
    K = int(abs((math.log(C2, 2) + 1) / 2))
    K = K if K % 2 else K + 1
    w1d = nrm(ks[9], (K,))
    pad1 = (K - 1) // 2
    Band = np.zeros((C2, C2), np.float32)
    for c in range(C2):
        for t in range(K):
            j = c + t - pad1
            if 0 <= j < C2:
                Band[c, j] = w1d[t]

    # SpatialAttention Conv2d(2, 1, 7, padding=3) -> Toeplitz (2*HW, HW) matrix
    w_sa = nrm(ks[10], (1, 2, 7, 7), 0.2)                 # torch OIHW
    HW = H * W
    dy = np.arange(H)[:, None] - np.arange(H)[None, :] + 3     # (H, H)
    dx = np.arange(W)[:, None] - np.arange(W)[None, :] + 3     # (W, W)
    vy = (dy >= 0) & (dy < 7)
    vx = (dx >= 0) & (dx < 7)
    dyc = np.clip(dy, 0, 6)
    dxc = np.clip(dx, 0, 6)
    wv = w_sa[0][:, dyc[:, :, None, None], dxc[None, None, :, :]]   # (2,H,H,W,W)
    wv = wv * (vy[:, :, None, None] & vx[None, None, :, :]).astype(np.float32)
    Msa = wv.transpose(0, 1, 3, 2, 4).reshape(2 * HW, HW).astype(np.float32)

    w_sa_hwio = np.transpose(w_sa, (2, 3, 1, 0)).astype(np.float32)

    return dict(
        # kernel-layout params (channel-major)
        wg_k=jnp.asarray(Wg.T.copy()), bg_col=jnp.asarray(bg.reshape(Cint, 1)),
        wx_k=jnp.asarray(Wx.T.copy()), bx_col=jnp.asarray(bx.reshape(Cint, 1)),
        wpsi_row=jnp.asarray(wpsi_eff.reshape(1, Cint)),
        bpsi11=jnp.asarray(np.full((1, 1), bpsi_eff, np.float32)),
        Band=jnp.asarray(Band), Msa=jnp.asarray(Msa),
        # reference-layout params
        Wg_ref=jnp.asarray(Wg), bg_ref=jnp.asarray(bg),
        Wx_ref=jnp.asarray(Wx), bx_ref=jnp.asarray(bx),
        wpsi_ref=jnp.asarray(wpsi_eff), bpsi_ref=jnp.asarray(bpsi_eff),
        w1d=jnp.asarray(w1d), w_sa_hwio=jnp.asarray(w_sa_hwio))


# ----------------------------------------------------------------------------
# Pure-JAX reference (NHWC, lax conv for the 7x7) for validation.
# ----------------------------------------------------------------------------
def eff_reference(x_nchw, skip_nchw, p):
    N, C, H, W = x_nchw.shape
    x = jnp.transpose(x_nchw, (0, 2, 3, 1))
    skip = jnp.transpose(skip_nchw, (0, 2, 3, 1))
    xf = x.reshape(-1, C)
    sf = skip.reshape(-1, C)
    g1 = jnp.maximum(xf @ p['Wg_ref'] + p['bg_ref'], 0.0)
    x1 = jnp.maximum(sf @ p['Wx_ref'] + p['bx_ref'], 0.0)
    t = jnp.maximum(g1 + x1, 0.0)
    psi = jax.nn.sigmoid(t @ p['wpsi_ref'] + p['bpsi_ref'])
    eag = sf * psi[:, None] + sf
    cat = jnp.concatenate([eag.reshape(N, H, W, C), x], axis=-1)
    C2 = 2 * C
    v = jnp.mean(cat, axis=(1, 2))
    K = p['w1d'].shape[0]
    pad = (K - 1) // 2
    vpad = jnp.pad(v, ((0, 0), (pad, pad)))
    conv = sum(p['w1d'][t_] * vpad[:, t_:t_ + C2] for t_ in range(K))
    attn = jax.nn.sigmoid(conv)
    x2 = cat * attn[:, None, None, :]
    avg = jnp.mean(x2, -1, keepdims=True)
    mx = jnp.max(x2, -1, keepdims=True)
    stats = jnp.concatenate([avg, mx], -1)
    sa_logit = jax.lax.conv_general_dilated(
        stats, p['w_sa_hwio'], (1, 1), 'SAME',
        dimension_numbers=('NHWC', 'HWIO', 'NHWC'))
    sa = jax.nn.sigmoid(sa_logit)
    out = x2 * sa
    return jnp.transpose(out, (0, 3, 1, 2))


if __name__ == "__main__":
    # groups=32 requires in_dim % 32 == 0 and out_dim % 32 == 0
    N, in_dim, out_dim, H, W = 2, 32, 32, 16, 16
    params = init_eff_params(in_dim, out_dim, H, W, num_groups=32, seed=0)

    key = jax.random.PRNGKey(0)
    kx, ks = jax.random.split(key)
    x = jax.random.normal(kx, (N, in_dim, H, W), jnp.float32)
    skip = jax.random.normal(ks, (N, in_dim, H, W), jnp.float32)

    out = jax.jit(eff_forward)(x, skip, params)
    out = jax.block_until_ready(out)

    ref = eff_reference(x, skip, params)
    np.testing.assert_allclose(np.asarray(out), np.asarray(ref),
                               rtol=1e-2, atol=1e-2)
    print("KERNEL_OK")
</pallas_src>

<mosaic_0001>
module attributes {stable_mosaic.version = 11 : i64} {
  func.func @eff_kernel(%arg0: i32, %arg1: memref<1x32x256xf32, #tpu.memory_space<vmem>>, %arg2: memref<1x32x256xf32, #tpu.memory_space<vmem>>, %arg3: memref<32x32xf32, #tpu.memory_space<vmem>>, %arg4: memref<32x1xf32, #tpu.memory_space<vmem>>, %arg5: memref<32x32xf32, #tpu.memory_space<vmem>>, %arg6: memref<32x1xf32, #tpu.memory_space<vmem>>, %arg7: memref<1x32xf32, #tpu.memory_space<vmem>>, %arg8: memref<1x1xf32, #tpu.memory_space<vmem>>, %arg9: memref<64x64xf32, #tpu.memory_space<vmem>>, %arg10: memref<512x256xf32, #tpu.memory_space<vmem>>, %arg11: memref<1x64x256xf32, #tpu.memory_space<vmem>>) attributes {dimension_semantics = [#tpu.dimension_semantics<parallel>], iteration_bounds = array<i64: 2>, scalar_prefetch = 0 : i64, scratch_operands = 0 : i64, tpu.core_type = #tpu.core_type<tc>, window_params = [{transform_indices = @transform_0, window_bounds = array<i64: 1, 32, 256>}, {transform_indices = @transform_1, window_bounds = array<i64: 1, 32, 256>}, {pipeline_mode = #tpu.pipeline_mode<synchronous>, transform_indices = @transform_2, window_bounds = array<i64: 32, 32>}, {pipeline_mode = #tpu.pipeline_mode<synchronous>, transform_indices = @transform_3, window_bounds = array<i64: 32, 1>}, {pipeline_mode = #tpu.pipeline_mode<synchronous>, transform_indices = @transform_4, window_bounds = array<i64: 32, 32>}, {pipeline_mode = #tpu.pipeline_mode<synchronous>, transform_indices = @transform_5, window_bounds = array<i64: 32, 1>}, {pipeline_mode = #tpu.pipeline_mode<synchronous>, transform_indices = @transform_6, window_bounds = array<i64: 1, 32>}, {pipeline_mode = #tpu.pipeline_mode<synchronous>, transform_indices = @transform_7, window_bounds = array<i64: 1, 1>}, {pipeline_mode = #tpu.pipeline_mode<synchronous>, transform_indices = @transform_8, window_bounds = array<i64: 64, 64>}, {pipeline_mode = #tpu.pipeline_mode<synchronous>, transform_indices = @transform_9, window_bounds = array<i64: 512, 256>}, {transform_indices = @transform_10, window_bounds = array<i64: 1, 64, 256>}]} {
    %c0 = arith.constant 0 : index
    %c0_0 = arith.constant 0 : index
    %c0_1 = arith.constant 0 : index
    %0 = vector.load %arg1[%c0, %c0_0, %c0_1] : memref<1x32x256xf32, #tpu.memory_space<vmem>>, vector<1x32x256xf32>
    %1 = vector.shape_cast %0 : vector<1x32x256xf32> to vector<32x256xf32>
    %c0_2 = arith.constant 0 : index
    %c0_3 = arith.constant 0 : index
    %c0_4 = arith.constant 0 : index
    %2 = vector.load %arg2[%c0_2, %c0_3, %c0_4] : memref<1x32x256xf32, #tpu.memory_space<vmem>>, vector<1x32x256xf32>
    %3 = vector.shape_cast %2 : vector<1x32x256xf32> to vector<32x256xf32>
    %c0_5 = arith.constant 0 : index
    %c0_6 = arith.constant 0 : index
    %4 = vector.load %arg3[%c0_5, %c0_6] : memref<32x32xf32, #tpu.memory_space<vmem>>, vector<32x32xf32>
    %cst = arith.constant dense<0.000000e+00> : vector<32x256xf32>
    %5 = tpu.matmul %4, %1, %cst {dimension_numbers = #tpu.dot_dimension_numbers<[1], [0], [0], [1], [0, 0, 1, 1], [], []>} : vector<32x32xf32>, vector<32x256xf32>, vector<32x256xf32> -> vector<32x256xf32>
    %c0_7 = arith.constant 0 : index
    %c0_8 = arith.constant 0 : index
    %6 = vector.load %arg4[%c0_7, %c0_8] : memref<32x1xf32, #tpu.memory_space<vmem>>, vector<32x1xf32>
    %7 = vector.broadcast %6 : vector<32x1xf32> to vector<32x256xf32>
    %8 = arith.addf %5, %7 : vector<32x256xf32>
    %cst_9 = arith.constant 0.000000e+00 : f32
    %9 = vector.broadcast %cst_9 : f32 to vector<32x256xf32>
    %10 = arith.maximumf %8, %9 : vector<32x256xf32>
    %c0_10 = arith.constant 0 : index
    %c0_11 = arith.constant 0 : index
    %11 = vector.load %arg5[%c0_10, %c0_11] : memref<32x32xf32, #tpu.memory_space<vmem>>, vector<32x32xf32>
    %cst_12 = arith.constant dense<0.000000e+00> : vector<32x256xf32>
    %12 = tpu.matmul %11, %3, %cst_12 {dimension_numbers = #tpu.dot_dimension_numbers<[1], [0], [0], [1], [0, 0, 1, 1], [], []>} : vector<32x32xf32>, vector<32x256xf32>, vector<32x256xf32> -> vector<32x256xf32>
    %c0_13 = arith.constant 0 : index
    %c0_14 = arith.constant 0 : index
    %13 = vector.load %arg6[%c0_13, %c0_14] : memref<32x1xf32, #tpu.memory_space<vmem>>, vector<32x1xf32>
    %14 = vector.broadcast %13 : vector<32x1xf32> to vector<32x256xf32>
    %15 = arith.addf %12, %14 : vector<32x256xf32>
    %cst_15 = arith.constant 0.000000e+00 : f32
    %16 = vector.broadcast %cst_15 : f32 to vector<32x256xf32>
    %17 = arith.maximumf %15, %16 : vector<32x256xf32>
    %18 = arith.addf %10, %17 : vector<32x256xf32>
    %cst_16 = arith.constant 0.000000e+00 : f32
    %19 = vector.broadcast %cst_16 : f32 to vector<32x256xf32>
    %20 = arith.maximumf %18, %19 : vector<32x256xf32>
    %c0_17 = arith.constant 0 : index
    %c0_18 = arith.constant 0 : index
    %21 = vector.load %arg7[%c0_17, %c0_18] : memref<1x32xf32, #tpu.memory_space<vmem>>, vector<1x32xf32>
    %cst_19 = arith.constant dense<0.000000e+00> : vector<1x256xf32>
    %22 = tpu.matmul %21, %20, %cst_19 {dimension_numbers = #tpu.dot_dimension_numbers<[1], [0], [0], [1], [0, 0, 1, 1], [], []>} : vector<1x32xf32>, vector<32x256xf32>, vector<1x256xf32> -> vector<1x256xf32>
    %c0_20 = arith.constant 0 : index
    %c0_21 = arith.constant 0 : index
    %23 = vector.load %arg8[%c0_20, %c0_21] : memref<1x1xf32, #tpu.memory_space<vmem>>, vector<1x1xf32>
    %24 = vector.broadcast %23 : vector<1x1xf32> to vector<1x256xf32>
    %25 = arith.addf %22, %24 : vector<1x256xf32>
    %cst_22 = arith.constant 0.000000e+00 : f32
    %26 = vector.broadcast %cst_22 : f32 to vector<1x256xf32>
    %27 = arith.subf %26, %25 : vector<1x256xf32>
    %28 = math.exp %27 : vector<1x256xf32>
    %cst_23 = arith.constant 1.000000e+00 : f32
    %29 = vector.broadcast %cst_23 : f32 to vector<1x256xf32>
    %30 = arith.addf %29, %28 : vector<1x256xf32>
    %31 = tpu.reciprocal %30 {approx = true} : vector<1x256xf32> -> vector<1x256xf32>
    %cst_24 = arith.constant 1.000000e+00 : f32
    %32 = vector.broadcast %cst_24 : f32 to vector<1x256xf32>
    %33 = arith.addf %31, %32 : vector<1x256xf32>
    %34 = vector.broadcast %33 : vector<1x256xf32> to vector<32x256xf32>
    %35 = arith.mulf %3, %34 : vector<32x256xf32>
    %36 = tpu.concatenate %35, %1 in 0 : vector<32x256xf32>, vector<32x256xf32> -> vector<64x256xf32>
    %c0_25 = arith.constant 0 : index
    %c0_26 = arith.constant 0 : index
    %37 = vector.load %arg9[%c0_25, %c0_26] : memref<64x64xf32, #tpu.memory_space<vmem>>, vector<64x64xf32>
    %cst_27 = arith.constant dense<0.000000e+00> : vector<64x256xf32>
    %38 = tpu.matmul %37, %36, %cst_27 {dimension_numbers = #tpu.dot_dimension_numbers<[1], [0], [0], [1], [0, 0, 1, 1], [], []>} : vector<64x64xf32>, vector<64x256xf32>, vector<64x256xf32> -> vector<64x256xf32>
    %cst_28 = arith.constant dense<0.000000e+00> : vector<64xf32>
    %39 = vector.multi_reduction <add>, %38, %cst_28 [1] : vector<64x256xf32> to vector<64xf32>
    %40 = vector.shape_cast %39 : vector<64xf32> to vector<64x1xf32>
    %cst_29 = arith.constant 2.560000e+02 : f32
    %41 = vector.broadcast %cst_29 : f32 to vector<64x1xf32>
    %42 = arith.divf %40, %41 : vector<64x1xf32>
    %cst_30 = arith.constant 0.000000e+00 : f32
    %43 = vector.broadcast %cst_30 : f32 to vector<64x1xf32>
    %44 = arith.subf %43, %42 : vector<64x1xf32>
    %45 = math.exp %44 : vector<64x1xf32>
    %cst_31 = arith.constant 1.000000e+00 : f32
    %46 = vector.broadcast %cst_31 : f32 to vector<64x1xf32>
    %47 = arith.addf %46, %45 : vector<64x1xf32>
    %48 = tpu.reciprocal %47 {approx = true} : vector<64x1xf32> -> vector<64x1xf32>
    %49 = vector.broadcast %48 : vector<64x1xf32> to vector<64x256xf32>
    %50 = arith.mulf %36, %49 : vector<64x256xf32>
    %cst_32 = arith.constant dense<0.000000e+00> : vector<256xf32>
    %51 = vector.multi_reduction <add>, %50, %cst_32 [0] : vector<64x256xf32> to vector<256xf32>
    %52 = vector.shape_cast %51 : vector<256xf32> to vector<1x256xf32>
    %cst_33 = arith.constant 6.400000e+01 : f32
    %53 = vector.broadcast %cst_33 : f32 to vector<1x256xf32>
    %54 = arith.divf %52, %53 : vector<1x256xf32>
    %cst_34 = arith.constant dense<0xFF800000> : vector<256xf32>
    %55 = vector.multi_reduction <maximumf>, %50, %cst_34 [0] : vector<64x256xf32> to vector<256xf32>
    %56 = vector.shape_cast %55 : vector<256xf32> to vector<1x256xf32>
    %57 = tpu.concatenate %54, %56 in 1 : vector<1x256xf32>, vector<1x256xf32> -> vector<1x512xf32>
    %c0_35 = arith.constant 0 : index
    %c0_36 = arith.constant 0 : index
    %58 = vector.load %arg10[%c0_35, %c0_36] : memref<512x256xf32, #tpu.memory_space<vmem>>, vector<512x256xf32>
    %cst_37 = arith.constant dense<0.000000e+00> : vector<1x256xf32>
    %59 = tpu.matmul %57, %58, %cst_37 {dimension_numbers = #tpu.dot_dimension_numbers<[1], [0], [0], [1], [0, 0, 1, 1], [], []>} : vector<1x512xf32>, vector<512x256xf32>, vector<1x256xf32> -> vector<1x256xf32>
    %cst_38 = arith.constant 0.000000e+00 : f32
    %60 = vector.broadcast %cst_38 : f32 to vector<1x256xf32>
    %61 = arith.subf %60, %59 : vector<1x256xf32>
    %62 = math.exp %61 : vector<1x256xf32>
    %cst_39 = arith.constant 1.000000e+00 : f32
    %63 = vector.broadcast %cst_39 : f32 to vector<1x256xf32>
    %64 = arith.addf %63, %62 : vector<1x256xf32>
    %65 = tpu.reciprocal %64 {approx = true} : vector<1x256xf32> -> vector<1x256xf32>
    %66 = vector.broadcast %65 : vector<1x256xf32> to vector<64x256xf32>
    %67 = arith.mulf %50, %66 : vector<64x256xf32>
    %c0_40 = arith.constant 0 : index
    %c0_41 = arith.constant 0 : index
    %c0_42 = arith.constant 0 : index
    %68 = vector.load %arg11[%c0_40, %c0_41, %c0_42] : memref<1x64x256xf32, #tpu.memory_space<vmem>>, vector<1x64x256xf32>
    %69 = vector.shape_cast %68 : vector<1x64x256xf32> to vector<64x256xf32>
    %70 = vector.shape_cast %67 : vector<64x256xf32> to vector<1x64x256xf32>
    tpu.vector_store %arg11[%c0_40, %c0_41, %c0_42], %70 {strides = array<i32>} : memref<1x64x256xf32, #tpu.memory_space<vmem>>, vector<1x64x256xf32>,
    return
  }
  func.func @transform_0(%arg0: i32) -> (i32, i32, i32) {
    %c0_i32 = arith.constant 0 : i32
    %c0_i32_0 = arith.constant 0 : i32
    %c0_i32_1 = arith.constant 0 : i32
    return %arg0, %c0_i32, %c0_i32_0 : i32, i32, i32
  }
  func.func @transform_1(%arg0: i32) -> (i32, i32, i32) {
    %c0_i32 = arith.constant 0 : i32
    %c0_i32_0 = arith.constant 0 : i32
    %c0_i32_1 = arith.constant 0 : i32
    return %arg0, %c0_i32, %c0_i32_0 : i32, i32, i32
  }
  func.func @transform_2(%arg0: i32) -> (i32, i32) {
    %c0_i32 = arith.constant 0 : i32
    %c0_i32_0 = arith.constant 0 : i32
    %c0_i32_1 = arith.constant 0 : i32
    return %c0_i32, %c0_i32_0 : i32, i32
  }
  func.func @transform_3(%arg0: i32) -> (i32, i32) {
    %c0_i32 = arith.constant 0 : i32
    %c0_i32_0 = arith.constant 0 : i32
    %c0_i32_1 = arith.constant 0 : i32
    return %c0_i32, %c0_i32_0 : i32, i32
  }
  func.func @transform_4(%arg0: i32) -> (i32, i32) {
    %c0_i32 = arith.constant 0 : i32
    %c0_i32_0 = arith.constant 0 : i32
    %c0_i32_1 = arith.constant 0 : i32
    return %c0_i32, %c0_i32_0 : i32, i32
  }
  func.func @transform_5(%arg0: i32) -> (i32, i32) {
    %c0_i32 = arith.constant 0 : i32
    %c0_i32_0 = arith.constant 0 : i32
    %c0_i32_1 = arith.constant 0 : i32
    return %c0_i32, %c0_i32_0 : i32, i32
  }
  func.func @transform_6(%arg0: i32) -> (i32, i32) {
    %c0_i32 = arith.constant 0 : i32
    %c0_i32_0 = arith.constant 0 : i32
    %c0_i32_1 = arith.constant 0 : i32
    return %c0_i32, %c0_i32_0 : i32, i32
  }
  func.func @transform_7(%arg0: i32) -> (i32, i32) {
    %c0_i32 = arith.constant 0 : i32
    %c0_i32_0 = arith.constant 0 : i32
    %c0_i32_1 = arith.constant 0 : i32
    return %c0_i32, %c0_i32_0 : i32, i32
  }
  func.func @transform_8(%arg0: i32) -> (i32, i32) {
    %c0_i32 = arith.constant 0 : i32
    %c0_i32_0 = arith.constant 0 : i32
    %c0_i32_1 = arith.constant 0 : i32
    return %c0_i32, %c0_i32_0 : i32, i32
  }
  func.func @transform_9(%arg0: i32) -> (i32, i32) {
    %c0_i32 = arith.constant 0 : i32
    %c0_i32_0 = arith.constant 0 : i32
    %c0_i32_1 = arith.constant 0 : i32
    return %c0_i32, %c0_i32_0 : i32, i32
  }
  func.func @transform_10(%arg0: i32) -> (i32, i32, i32) {
    %c0_i32 = arith.constant 0 : i32
    %c0_i32_0 = arith.constant 0 : i32
    %c0_i32_1 = arith.constant 0 : i32
    return %arg0, %c0_i32, %c0_i32_0 : i32, i32, i32
  }
}

</mosaic_0001>

<llo_original>
// kernel: eff_forward.1
$region0: #{eff_forward.1}
  #allocation0 [shape = 'u32[]', space=smem, size = 0x4, offset = 0x4, fixed_abs, tag = 'smem constant byte address 0x4 - core index']
  #allocation1 [shape = 'u32[72,128]{1,0:T(1,128)}', space=vmem, size = 0x9000, scoped, tag = 'internal scratch']
  #allocation2 [shape = 'f32[1,1]{1,0:T(1,128)S(1)}', space=vmem, size = 0x200, scoped, tag = 'scoped memory for eff_forward.1']
  %s0 = inlined_call_operand.vmem [shape: f32[2,32,256], index: 0, kind: input, shape index: {}]
  %s1 = inlined_call_operand.vmem [shape: f32[2,32,256], index: 1, kind: input, shape index: {}]
  %s2 = inlined_call_operand.vmem [shape: f32[32,32], index: 2, kind: input, shape index: {}]
  %s3 = inlined_call_operand.vmem [shape: f32[32,1], index: 3, kind: input, shape index: {}]
  %s4 = inlined_call_operand.vmem [shape: f32[32,32], index: 4, kind: input, shape index: {}]
  %s5 = inlined_call_operand.vmem [shape: f32[32,1], index: 5, kind: input, shape index: {}]
  %s6 = inlined_call_operand.vmem [shape: f32[1,32], index: 6, kind: input, shape index: {}]
  %s7 = inlined_call_operand.<no memory space> [shape: f32[1,1], index: 7, kind: input, shape index: {}]
  %s8 = inlined_call_operand.vmem [shape: f32[64,64], index: 8, kind: input, shape index: {}]
  %s9 = inlined_call_operand.hbm [shape: f32[512,256], index: 9, kind: input, shape index: {}]
  %s10 = inlined_call_operand.vmem [shape: f32[2,64,256], index: 10, kind: output, shape index: {}]
  %s11 = sld [smem:[#allocation0]]
  $region77: #{eff_forward.1} parent=0
    _
  %s13 = ssub.s32 1, %s11
  %s14 = scalar_select 0, %s13, %s11
  %v15 = vstv %s7
  %16 = vst [vmem:[#allocation2] sm:$0x1] %v15
  $region1: #{eff_forward.1} parent=0
    #allocation3 [shape = 'u8[524288]{0}', space=vmem, size = 0x80000, scoped, tag = 'input window, operand 9, single buffered']
    #allocation4 [shape = 's32[2]{0}', space=sflag, size = 0x8, scoped, tag = 'scoped memory for eff_forward.1']
    %17 = vsyncpa [#allocation4], 0
    loop: start=0, step=1, limit=4
    $region2: #{eff_forward.1} parent=1 // loop_pre_header
      _
    $region3: #{eff_forward.1} parent=1 // loop_header
      %s19 = sphi 0, %s23
      %p20 = scmp.ge.s32.totalorder %s19, 4
      %s29 = sphi 0, %s31
      %s32 = sphi 0, %s29
      %s33 = sphi 0, %s32
      %s49 = sphi 0, %s33
      %s55 = sphi 0, %s57
      %s58 = sphi 0, %s55
      %s59 = sphi 0, %s58
      %s75 = sphi 0, %s59
      %s79 = sphi 0, %s79
      %s81 = sphi 0, %s79
      %s82 = sphi 0, %s81
      %s96 = sphi 0, %s82
      %s100 = sphi 0, %s100
      %s102 = sphi 0, %s100
      %s103 = sphi 0, %s102
      %s117 = sphi 0, %s103
      %s121 = sphi 0, %s121
      %s123 = sphi 0, %s121
      %s124 = sphi 0, %s123
      %s138 = sphi 0, %s124
      %s142 = sphi 0, %s142
      %s144 = sphi 0, %s142
      %s145 = sphi 0, %s144
      %s159 = sphi 0, %s145
      %s163 = sphi 0, %s163
      %s165 = sphi 0, %s163
      %s166 = sphi 0, %s165
      %s180 = sphi 0, %s166
      %s184 = sphi 0, %s184
      %s186 = sphi 0, %s184
      %s187 = sphi 0, %s186
      %s201 = sphi 0, %s187
      %s205 = sphi 0, %s205
      %s207 = sphi 0, %s205
      %s208 = sphi 0, %s207
      %s222 = sphi 0, %s208
      %s226 = sphi 0, %s226
      %s228 = sphi 0, %s226
      %s229 = sphi 0, %s228
      %s243 = sphi 0, %s229
      %s249 = sphi 0, %s251
      %s252 = sphi 0, %s249
      %s253 = sphi 0, %s252
      %s269 = sphi 0, %s253
    $region4: #{eff_forward.1} parent=1 // loop_header_branch
      %22 = sbr.rel (%p20) target = $region8
    $region5: #{eff_forward.1} parent=1 // loop_body
      %s24 = ssub.s32 %s19, 1
      %s25 = ssub.s32 %s19, 2
      %s26 = sadd.s32 %s19, 1
      %s27 = ssub.s32 %s19, %s26
      %p28 = scmp.eq.s32.totalorder %s27, 0
      %s30 = sadd.s32 %s29, 1
      %s31 = scalar_select %p28, %s29, %s30
      %p34 = pneg %p28
      %p35 = scmp.eq.s32.totalorder %s19, 1
      %p36 = por %p34, %p35
      %p37 = scmp.ne.s32.totalorder %s29, %s32
      %p38 = scmp.eq.s32.totalorder %s19, 0
      %p39 = por %p37, %p38
      %p40 = scmp.ne.s32.totalorder %s29, %s32
      %p41 = scmp.eq.s32.totalorder %s24, 1
      %p42 = por %p40, %p41
      %p43 = scmp.ne.s32.totalorder %s32, %s33
      %p44 = scmp.eq.s32.totalorder %s24, 0
      %p45 = por %p43, %p44
      %p46 = scmp.ne.s32.totalorder %s32, %s33
      %p47 = scmp.eq.s32.totalorder %s25, 1
      %p48 = por %p46, %p47
      %p50 = scmp.ne.s32.totalorder %s33, %s49
      %p51 = scmp.eq.s32.totalorder %s25, 0
      %p52 = por %p50, %p51
      %s53 = ssub.s32 %s19, %s26
      %p54 = scmp.eq.s32.totalorder %s53, 0
      %s56 = sadd.s32 %s55, 1
      %s57 = scalar_select %p54, %s55, %s56
      %p60 = pneg %p54
      %p61 = scmp.eq.s32.totalorder %s19, 1
      %p62 = por %p60, %p61
      %p63 = scmp.ne.s32.totalorder %s55, %s58
      %p64 = scmp.eq.s32.totalorder %s19, 0
      %p65 = por %p63, %p64
      %p66 = scmp.ne.s32.totalorder %s55, %s58
      %p67 = scmp.eq.s32.totalorder %s24, 1
      %p68 = por %p66, %p67
      %p69 = scmp.ne.s32.totalorder %s58, %s59
      %p70 = scmp.eq.s32.totalorder %s24, 0
      %p71 = por %p69, %p70
      %p72 = scmp.ne.s32.totalorder %s58, %s59
      %p73 = scmp.eq.s32.totalorder %s25, 1
      %p74 = por %p72, %p73
      %p76 = scmp.ne.s32.totalorder %s59, %s75
      %p77 = scmp.eq.s32.totalorder %s25, 0
      %p78 = por %p76, %p77
      %s80 = sadd.s32 %s79, 1
      %p83 = scmp.eq.s32.totalorder %s19, 1
      %p84 = scmp.ne.s32.totalorder %s79, %s81
      %p85 = scmp.eq.s32.totalorder %s19, 0
      %p86 = por %p84, %p85
      %p87 = scmp.ne.s32.totalorder %s79, %s81
      %p88 = scmp.eq.s32.totalorder %s24, 1
      %p89 = por %p87, %p88
      %p90 = scmp.ne.s32.totalorder %s81, %s82
      %p91 = scmp.eq.s32.totalorder %s24, 0
      %p92 = por %p90, %p91
      %p93 = scmp.ne.s32.totalorder %s81, %s82
      %p94 = scmp.eq.s32.totalorder %s25, 1
      %p95 = por %p93, %p94
      %p97 = scmp.ne.s32.totalorder %s82, %s96
      %p98 = scmp.eq.s32.totalorder %s25, 0
      %p99 = por %p97, %p98
      %s101 = sadd.s32 %s100, 1
      %p104 = scmp.eq.s32.totalorder %s19, 1
      %p105 = scmp.ne.s32.totalorder %s100, %s102
      %p106 = scmp.eq.s32.totalorder %s19, 0
      %p107 = por %p105, %p106
      %p108 = scmp.ne.s32.totalorder %s100, %s102
      %p109 = scmp.eq.s32.totalorder %s24, 1
      %p110 = por %p108, %p109
      %p111 = scmp.ne.s32.totalorder %s102, %s103
      %p112 = scmp.eq.s32.totalorder %s24, 0
      %p113 = por %p111, %p112
      %p114 = scmp.ne.s32.totalorder %s102, %s103
      %p115 = scmp.eq.s32.totalorder %s25, 1
      %p116 = por %p114, %p115
      %p118 = scmp.ne.s32.totalorder %s103, %s117
      %p119 = scmp.eq.s32.totalorder %s25, 0
      %p120 = por %p118, %p119
      %s122 = sadd.s32 %s121, 1
      %p125 = scmp.eq.s32.totalorder %s19, 1
      %p126 = scmp.ne.s32.totalorder %s121, %s123
      %p127 = scmp.eq.s32.totalorder %s19, 0
      %p128 = por %p126, %p127
      %p129 = scmp.ne.s32.totalorder %s121, %s123
      %p130 = scmp.eq.s32.totalorder %s24, 1
      %p131 = por %p129, %p130
      %p132 = scmp.ne.s32.totalorder %s123, %s124
      %p133 = scmp.eq.s32.totalorder %s24, 0
      %p134 = por %p132, %p133
      %p135 = scmp.ne.s32.totalorder %s123, %s124
      %p136 = scmp.eq.s32.totalorder %s25, 1
      %p137 = por %p135, %p136
      %p139 = scmp.ne.s32.totalorder %s124, %s138
      %p140 = scmp.eq.s32.totalorder %s25, 0
      %p141 = por %p139, %p140
      %s143 = sadd.s32 %s142, 1
      %p146 = scmp.eq.s32.totalorder %s19, 1
      %p147 = scmp.ne.s32.totalorder %s142, %s144
      %p148 = scmp.eq.s32.totalorder %s19, 0
      %p149 = por %p147, %p148
      %p150 = scmp.ne.s32.totalorder %s142, %s144
      %p151 = scmp.eq.s32.totalorder %s24, 1
      %p152 = por %p150, %p151
      %p153 = scmp.ne.s32.totalorder %s144, %s145
      %p154 = scmp.eq.s32.totalorder %s24, 0
      %p155 = por %p153, %p154
      %p156 = scmp.ne.s32.totalorder %s144, %s145
      %p157 = scmp.eq.s32.totalorder %s25, 1
      %p158 = por %p156, %p157
      %p160 = scmp.ne.s32.totalorder %s145, %s159
      %p161 = scmp.eq.s32.totalorder %s25, 0
      %p162 = por %p160, %p161
      %s164 = sadd.s32 %s163, 1
      %p167 = scmp.eq.s32.totalorder %s19, 1
      %p168 = scmp.ne.s32.totalorder %s163, %s165
      %p169 = scmp.eq.s32.totalorder %s19, 0
      %p170 = por %p168, %p169
      %p171 = scmp.ne.s32.totalorder %s163, %s165
      %p172 = scmp.eq.s32.totalorder %s24, 1
      %p173 = por %p171, %p172
      %p174 = scmp.ne.s32.totalorder %s165, %s166
      %p175 = scmp.eq.s32.totalorder %s24, 0
      %p176 = por %p174, %p175
      %p177 = scmp.ne.s32.totalorder %s165, %s166
      %p178 = scmp.eq.s32.totalorder %s25, 1
      %p179 = por %p177, %p178
      %p181 = scmp.ne.s32.totalorder %s166, %s180
      %p182 = scmp.eq.s32.totalorder %s25, 0
      %p183 = por %p181, %p182
      %s185 = sadd.s32 %s184, 1
      %p188 = scmp.eq.s32.totalorder %s19, 1
      %p189 = scmp.ne.s32.totalorder %s184, %s186
      %p190 = scmp.eq.s32.totalorder %s19, 0
      %p191 = por %p189, %p190
      %p192 = scmp.ne.s32.totalorder %s184, %s186
      %p193 = scmp.eq.s32.totalorder %s24, 1
      %p194 = por %p192, %p193
      %p195 = scmp.ne.s32.totalorder %s186, %s187
      %p196 = scmp.eq.s32.totalorder %s24, 0
      %p197 = por %p195, %p196
      %p198 = scmp.ne.s32.totalorder %s186, %s187
      %p199 = scmp.eq.s32.totalorder %s25, 1
      %p200 = por %p198, %p199
      %p202 = scmp.ne.s32.totalorder %s187, %s201
      %p203 = scmp.eq.s32.totalorder %s25, 0
      %p204 = por %p202, %p203
      %s206 = sadd.s32 %s205, 1
      %p209 = scmp.eq.s32.totalorder %s19, 1
      %p210 = scmp.ne.s32.totalorder %s205, %s207
      %p211 = scmp.eq.s32.totalorder %s19, 0
      %p212 = por %p210, %p211
      %p213 = scmp.ne.s32.totalorder %s205, %s207
      %p214 = scmp.eq.s32.totalorder %s24, 1
      %p215 = por %p213, %p214
      %p216 = scmp.ne.s32.totalorder %s207, %s208
      %p217 = scmp.eq.s32.totalorder %s24, 0
      %p218 = por %p216, %p217
      %p219 = scmp.ne.s32.totalorder %s207, %s208
      %p220 = scmp.eq.s32.totalorder %s25, 1
      %p221 = por %p219, %p220
      %p223 = scmp.ne.s32.totalorder %s208, %s222
      %p224 = scmp.eq.s32.totalorder %s25, 0
      %p225 = por %p223, %p224
      %s227 = sadd.s32 %s226, 1
      %p230 = scmp.eq.s32.totalorder %s19, 1
      %p231 = scmp.ne.s32.totalorder %s226, %s228
      %p232 = scmp.eq.s32.totalorder %s19, 0
      %p233 = por %p231, %p232
      %p234 = scmp.ne.s32.totalorder %s226, %s228
      %p235 = scmp.eq.s32.totalorder %s24, 1
      %p236 = por %p234, %p235
      %p237 = scmp.ne.s32.totalorder %s228, %s229
      %p238 = scmp.eq.s32.totalorder %s24, 0
      %p239 = por %p237, %p238
      %p240 = scmp.ne.s32.totalorder %s228, %s229
      %p241 = scmp.eq.s32.totalorder %s25, 1
      %p242 = por %p240, %p241
      %p244 = scmp.ne.s32.totalorder %s229, %s243
      %p245 = scmp.eq.s32.totalorder %s25, 0
      %p246 = por %p244, %p245
      %s247 = ssub.s32 %s19, %s26
      %p248 = scmp.eq.s32.totalorder %s247, 0
      %s250 = sadd.s32 %s249, 1
      %s251 = scalar_select %p248, %s249, %s250
      %p254 = pneg %p248
      %p255 = scmp.eq.s32.totalorder %s19, 1
      %p256 = por %p254, %p255
      %p257 = scmp.ne.s32.totalorder %s249, %s252
      %p258 = scmp.eq.s32.totalorder %s19, 0
      %p259 = por %p257, %p258
      %p260 = scmp.ne.s32.totalorder %s249, %s252
      %p261 = scmp.eq.s32.totalorder %s24, 1
      %p262 = por %p260, %p261
      %p263 = scmp.ne.s32.totalorder %s252, %s253
      %p264 = scmp.eq.s32.totalorder %s24, 0
      %p265 = por %p263, %p264
      %p266 = scmp.ne.s32.totalorder %s252, %s253
      %p267 = scmp.eq.s32.totalorder %s25, 1
      %p268 = por %p266, %p267
      %p270 = scmp.ne.s32.totalorder %s253, %s269
      %p271 = scmp.eq.s32.totalorder %s25, 0
      %p272 = por %p270, %p271
      %p273 = scmp.le.s32.totalorder 1, %s19
      %p274 = scmp.lt.s32.totalorder %s19, 3
      %p275 = pnand %p273, %p274
      %p276 = pneg %p275
      // Predicated region
      $region9: #{eff_forward.1} parent=5 // pred_check
        _
      $region10: #{eff_forward.1} parent=5 // pred_check_branch
        %278 = sbr.rel (%p275) target = $region12
      $region11: #{eff_forward.1} parent=5 // pred_region
        %s279 = ssub.s32 %s19, 1
        // Predicated region
        $region13: #{eff_forward.1} parent=11 // pred_check
          %p280 = pneg %p92
        $region14: #{eff_forward.1} parent=11 // pred_check_branch
          %282 = sbr.rel (%p280) target = $region16
        $region15: #{eff_forward.1} parent=11 // pred_region
          _
        $region16: #{eff_forward.1} parent=11 // pred_fallthru
          _
        // Predicated region
        $region17: #{eff_forward.1} parent=11 // pred_check
          %p283 = pneg %p113
        $region18: #{eff_forward.1} parent=11 // pred_check_branch
          %285 = sbr.rel (%p283) target = $region20
        $region19: #{eff_forward.1} parent=11 // pred_region
          _
        $region20: #{eff_forward.1} parent=11 // pred_fallthru
          _
        // Predicated region
        $region21: #{eff_forward.1} parent=11 // pred_check
          %p286 = pneg %p134
        $region22: #{eff_forward.1} parent=11 // pred_check_branch
          %288 = sbr.rel (%p286) target = $region24
        $region23: #{eff_forward.1} parent=11 // pred_region
          _
        $region24: #{eff_forward.1} parent=11 // pred_fallthru
          _
        // Predicated region
        $region25: #{eff_forward.1} parent=11 // pred_check
          %p289 = pneg %p155
        $region26: #{eff_forward.1} parent=11 // pred_check_branch
          %291 = sbr.rel (%p289) target = $region28
        $region27: #{eff_forward.1} parent=11 // pred_region
          _
        $region28: #{eff_forward.1} parent=11 // pred_fallthru
          _
        // Predicated region
        $region29: #{eff_forward.1} parent=11 // pred_check
          %p292 = pneg %p176
        $region30: #{eff_forward.1} parent=11 // pred_check_branch
          %294 = sbr.rel (%p292) target = $region32
        $region31: #{eff_forward.1} parent=11 // pred_region
          _
        $region32: #{eff_forward.1} parent=11 // pred_fallthru
          _
        // Predicated region
        $region33: #{eff_forward.1} parent=11 // pred_check
          %p295 = pneg %p197
        $region34: #{eff_forward.1} parent=11 // pred_check_branch
          %297 = sbr.rel (%p295) target = $region36
        $region35: #{eff_forward.1} parent=11 // pred_region
          _
        $region36: #{eff_forward.1} parent=11 // pred_fallthru
          _
        // Predicated region
        $region37: #{eff_forward.1} parent=11 // pred_check
          %p298 = pneg %p218
        $region38: #{eff_forward.1} parent=11 // pred_check_branch
          %300 = sbr.rel (%p298) target = $region40
        $region39: #{eff_forward.1} parent=11 // pred_region
          _
        $region40: #{eff_forward.1} parent=11 // pred_fallthru
          _
        // Predicated region
        $region41: #{eff_forward.1} parent=11 // pred_check
          %p301 = pneg %p239
        $region42: #{eff_forward.1} parent=11 // pred_check_branch
          %303 = sbr.rel (%p301) target = $region44
        $region43: #{eff_forward.1} parent=11 // pred_region
          %305 = vsyncadd [#allocation4], 0
          %s306 = sshll.u32 %s9, 4
          %s307 = int_to_ptr.hbm [resolvable:$true] %s306
          %s308 = sshll.u32 [#allocation3], 4
          %s309 = int_to_ptr.vmem [resolvable:$true] %s308
          %314 = dma.hbm_to_vmem [thread:$0]  %s307, 16384, %s309, [#allocation4], 256, 256, 16
        $region44: #{eff_forward.1} parent=11 // pred_fallthru
          _
      $region12: #{eff_forward.1} parent=5 // pred_fallthru
        _
      %p315 = scmp.lt.s32.totalorder %s19, 2
      // Predicated region
      $region45: #{eff_forward.1} parent=5 // pred_check
        %p316 = pneg %p315
      $region46: #{eff_forward.1} parent=5 // pred_check_branch
        %318 = sbr.rel (%p316) target = $region48
      $region47: #{eff_forward.1} parent=5 // pred_region
        // Predicated region
        $region49: #{eff_forward.1} parent=47 // pred_check
          %p319 = pneg %p39
        $region50: #{eff_forward.1} parent=47 // pred_check_branch
          %321 = sbr.rel (%p319) target = $region52
        $region51: #{eff_forward.1} parent=47 // pred_region
          %p322 = scmp.lt.s32.totalorder %s19, 1
          %s323 = scalar_select %p322, %s19, 1
          %s324 = smul.addr %s323, 8
          %s325 = smul.addr %s324, 8
          %s326 = scalar_lea.vmem %s0, %s325
        $region52: #{eff_forward.1} parent=47 // pred_fallthru
          _
        // Predicated region
        $region53: #{eff_forward.1} parent=47 // pred_check
          %p327 = pneg %p65
        $region54: #{eff_forward.1} parent=47 // pred_check_branch
          %329 = sbr.rel (%p327) target = $region56
        $region55: #{eff_forward.1} parent=47 // pred_region
          %p330 = scmp.lt.s32.totalorder %s19, 1
          %s331 = scalar_select %p330, %s19, 1
          %s332 = smul.addr %s331, 8
          %s333 = smul.addr %s332, 8
          %s334 = scalar_lea.vmem %s1, %s333
        $region56: #{eff_forward.1} parent=47 // pred_fallthru
          _
      $region48: #{eff_forward.1} parent=5 // pred_fallthru
        _
      %p335 = scmp.le.s32.totalorder 1, %s19
      %p336 = scmp.lt.s32.totalorder %s19, 3
      %p337 = pnand %p335, %p336
      %p338 = pneg %p337
      // Predicated region
      $region57: #{eff_forward.1} parent=5 // pred_check
        _
      $region58: #{eff_forward.1} parent=5 // pred_check_branch
        %340 = sbr.rel (%p337) target = $region60
      $region59: #{eff_forward.1} parent=5 // pred_region
        %s341 = ssub.s32 %s19, 1
        // Predicated region
        $region61: #{eff_forward.1} parent=59 // pred_check
          %p342 = pneg %p239
        $region62: #{eff_forward.1} parent=59 // pred_check_branch
          %344 = sbr.rel (%p342) target = $region64
        $region63: #{eff_forward.1} parent=59 // pred_region
          %346 = dma.done [#allocation4], 16384
        $region64: #{eff_forward.1} parent=59 // pred_fallthru
          _
        %p347 = scmp.lt.s32.totalorder %s24, 1
        %s348 = scalar_select %p347, %s24, 1
        %s349 = smul.addr %s348, 8
        %s350 = smul.addr %s349, 8
        %s351 = scalar_lea.vmem %s0, %s350
        %p352 = pneg %p45
        %p353 = pneg %p42
        %p354 = scmp.lt.s32.totalorder %s24, 1
        %s355 = scalar_select %p354, %s24, 1
        %s356 = smul.addr %s355, 8
        %s357 = smul.addr %s356, 8
        %s358 = scalar_lea.vmem %s1, %s357
        %p359 = pneg %p71
        %p360 = pneg %p68
        %p361 = pneg %p92
        %p362 = pneg %p89
        %p363 = pneg %p113
        %p364 = pneg %p110
        %p365 = pneg %p134
        %p366 = pneg %p131
        %p367 = pneg %p155
        %p368 = pneg %p152
        %p369 = pneg %p176
        %p370 = pneg %p173
        %p371 = pneg %p197
        %p372 = pneg %p194
        %p373 = pneg %p218
        %p374 = pneg %p215
        %p375 = pneg %p239
        %p376 = pneg %p236
        %p377 = pneg %p265
        %p378 = pneg %p262
        %p379 = scmp.lt.s32.totalorder %s24, 1
        %s380 = scalar_select %p379, %s24, 1
        %s381 = smul.addr %s380, 16
        %s382 = smul.addr %s381, 8
        %s383 = scalar_lea.vmem %s10, %s382
        %p384 = scmp.lt.s32.totalorder %s24, 1
        %s385 = scalar_select %p384, %s24, 1
        %s386 = smul.addr %s385, 8
        %s387 = smul.addr %s386, 8
        %s388 = scalar_lea.vmem %s0, %s387
        %p389 = scmp.lt.s32.totalorder %s24, 1
        %s390 = scalar_select %p389, %s24, 1
        %s391 = smul.addr %s390, 8
        %s392 = smul.addr %s391, 8
        %s393 = scalar_lea.vmem %s1, %s392
        %p394 = scmp.lt.s32.totalorder %s24, 1
        %s395 = scalar_select %p394, %s24, 1
        %s396 = smul.addr %s395, 16
        %s397 = smul.addr %s396, 8
        %s398 = scalar_lea.vmem %s10, %s397
        %v399 = vld [vmem:[%s388] sm:$0xff]
        %v400 = vld [vmem:[%s388 + $0x8] sm:$0xff]
        %v401 = vld [vmem:[%s388 + $0x10] sm:$0xff]
        %v402 = vld [vmem:[%s388 + $0x18] sm:$0xff]
        %v403 = vld [vmem:[%s388 + $0x20] sm:$0xff]
        %v404 = vld [vmem:[%s388 + $0x28] sm:$0xff]
        %v405 = vld [vmem:[%s388 + $0x30] sm:$0xff]
        %v406 = vld [vmem:[%s388 + $0x38] sm:$0xff]
        %v407 = vld [vmem:[%s393] sm:$0xff]
        %v408 = vld [vmem:[%s393 + $0x8] sm:$0xff]
        %v409 = vld [vmem:[%s393 + $0x10] sm:$0xff]
        %v410 = vld [vmem:[%s393 + $0x18] sm:$0xff]
        %v411 = vld [vmem:[%s393 + $0x20] sm:$0xff]
        %v412 = vld [vmem:[%s393 + $0x28] sm:$0xff]
        %v413 = vld [vmem:[%s393 + $0x30] sm:$0xff]
        %v414 = vld [vmem:[%s393 + $0x38] sm:$0xff]
        %v415 = vld [vmem:[%s2] sm:$0xff]
        %v416 = vld [vmem:[%s2 + $0x8] sm:$0xff]
        %v417 = vld [vmem:[%s2 + $0x10] sm:$0xff]
        %v418 = vld [vmem:[%s2 + $0x18] sm:$0xff]
        %v419 = vld [vmem:[%s3] sm:$0xff]
        %v420 = vld [vmem:[%s3 + $0x8] sm:$0xff]
        %v421 = vld [vmem:[%s3 + $0x10] sm:$0xff]
        %v422 = vld [vmem:[%s3 + $0x18] sm:$0xff]
        %424 = vset.pattern.permute.xlu0 0
        %425 = vperm.xlu0 %424, %v419
        %v426 = vpop.permute.xlu0 %425
        %429 = vset.pattern.permute.xlu0 0
        %430 = vperm.xlu0 %429, %v420
        %v431 = vpop.permute.xlu0 %430
        %434 = vset.pattern.permute.xlu0 0
        %435 = vperm.xlu0 %434, %v421
        %v436 = vpop.permute.xlu0 %435
        %439 = vset.pattern.permute.xlu0 0
        %440 = vperm.xlu0 %439, %v422
        %v441 = vpop.permute.xlu0 %440
        %vm443 = vcmask 261120
        %v445 = vsel %vm443, %v415, 0
        %v448 = vsel %vm443, %v416, 0
        %v451 = vsel %vm443, %v417, 0
        %v454 = vsel %vm443, %v418, 0
        %456 = vmatpush.msra.mxu0 0.0
        %457 = vmatpush.msra.mxu0 0.0
        %458 = vmatpush.msra.mxu0 0.0
        %459 = vmatpush.msra.mxu0 0.0
        %460 = vmatpush.msra.mxu0 0.0
        %461 = vmatpush.msra.mxu0 0.0
        %462 = vmatpush.msra.mxu0 0.0
        %463 = vmatpush.msra.mxu0 0.0
        %464 = vmatpush.msra.mxu0 0.0
        %465 = vmatpush.msra.mxu0 0.0
        %466 = vmatpush.msra.mxu0 0.0
        %467 = vmatpush.msra.mxu0 0.0
        %468 = vmatpush.msra.mxu0 %v405
        %469 = vmatpush.msra.mxu0 %v403
        %470 = vmatpush.msra.mxu0 %v401
        %471 = vmatpush.msra.mxu0 %v399
        %472 = vmatmul.f32.gmra.mxu0 %v445
        %v473 = vpop.f32.mrf.mxu0
        %v474 = vadd.f32 %v426, %v473
        %475 = vmatmul.f32.gmra.mxu0 %v448
        %v476 = vpop.f32.mrf.mxu0
        %v477 = vadd.f32 %v431, %v476
        %478 = vmatmul.f32.gmra.mxu0 %v451
        %v479 = vpop.f32.mrf.mxu0
        %v480 = vadd.f32 %v436, %v479
        %481 = vmatmul.f32.gmra.mxu0 %v454
        %v482 = vpop.f32.mrf.mxu0
        %v483 = vadd.f32 %v441, %v482
        %484 = vdwg.mxu0
        %485 = vmatpush.msra.mxu0 0.0
        %486 = vmatpush.msra.mxu0 0.0
        %487 = vmatpush.msra.mxu0 0.0
        %488 = vmatpush.msra.mxu0 0.0
        %489 = vmatpush.msra.mxu0 0.0
        %490 = vmatpush.msra.mxu0 0.0
        %491 = vmatpush.msra.mxu0 0.0
        %492 = vmatpush.msra.mxu0 0.0
        %493 = vmatpush.msra.mxu0 0.0
        %494 = vmatpush.msra.mxu0 0.0
        %495 = vmatpush.msra.mxu0 0.0
        %496 = vmatpush.msra.mxu0 0.0
        %497 = vmatpush.msra.mxu0 %v406
        %498 = vmatpush.msra.mxu0 %v404
        %499 = vmatpush.msra.mxu0 %v402
        %500 = vmatpush.msra.mxu0 %v400
        %501 = vmatmul.f32.gmra.mxu0 %v445
        %v502 = vpop.f32.mrf.mxu0
        %v503 = vadd.f32 %v426, %v502
        %504 = vmatmul.f32.gmra.mxu0 %v448
        %v505 = vpop.f32.mrf.mxu0
        %v506 = vadd.f32 %v431, %v505
        %507 = vmatmul.f32.gmra.mxu0 %v451
        %v508 = vpop.f32.mrf.mxu0
        %v509 = vadd.f32 %v436, %v508
        %510 = vmatmul.f32.gmra.mxu0 %v454
        %v511 = vpop.f32.mrf.mxu0
        %v512 = vadd.f32 %v441, %v511
        %513 = vdwg.mxu0
        %v514 = vmax.f32 %v474, 0.0
        %v515 = vmax.f32 %v503, 0.0
        %v516 = vmax.f32 %v477, 0.0
        %v517 = vmax.f32 %v506, 0.0
        %v518 = vmax.f32 %v480, 0.0
        %v519 = vmax.f32 %v509, 0.0
        %v520 = vmax.f32 %v483, 0.0
        %v521 = vmax.f32 %v512, 0.0
        %v522 = vld [vmem:[%s4] sm:$0xff]
        %v523 = vld [vmem:[%s4 + $0x8] sm:$0xff]
        %v524 = vld [vmem:[%s4 + $0x10] sm:$0xff]
        %v525 = vld [vmem:[%s4 + $0x18] sm:$0xff]
        %v526 = vld [vmem:[%s5] sm:$0xff]
        %v527 = vld [vmem:[%s5 + $0x8] sm:$0xff]
        %v528 = vld [vmem:[%s5 + $0x10] sm:$0xff]
        %v529 = vld [vmem:[%s5 + $0x18] sm:$0xff]
        %531 = vset.pattern.permute.xlu0 0
        %532 = vperm.xlu0 %531, %v526
        %v533 = vpop.permute.xlu0 %532
        %536 = vset.pattern.permute.xlu0 0
        %537 = vperm.xlu0 %536, %v527
        %v538 = vpop.permute.xlu0 %537
        %541 = vset.pattern.permute.xlu0 0
        %542 = vperm.xlu0 %541, %v528
        %v543 = vpop.permute.xlu0 %542
        %546 = vset.pattern.permute.xlu0 0
        %547 = vperm.xlu0 %546, %v529
        %v548 = vpop.permute.xlu0 %547
        %v551 = vsel %vm443, %v522, 0
        %v554 = vsel %vm443, %v523, 0
        %v557 = vsel %vm443, %v524, 0
        %v560 = vsel %vm443, %v525, 0
        %562 = vmatpush.msra.mxu0 0.0
        %563 = vmatpush.msra.mxu0 0.0
        %564 = vmatpush.msra.mxu0 0.0
        %565 = vmatpush.msra.mxu0 0.0
        %566 = vmatpush.msra.mxu0 0.0
        %567 = vmatpush.msra.mxu0 0.0
        %568 = vmatpush.msra.mxu0 0.0
        %569 = vmatpush.msra.mxu0 0.0
        %570 = vmatpush.msra.mxu0 0.0
        %571 = vmatpush.msra.mxu0 0.0
        %572 = vmatpush.msra.mxu0 0.0
        %573 = vmatpush.msra.mxu0 0.0
        %574 = vmatpush.msra.mxu0 %v413
        %575 = vmatpush.msra.mxu0 %v411
        %576 = vmatpush.msra.mxu0 %v409
        %577 = vmatpush.msra.mxu0 %v407
        %578 = vmatmul.f32.gmra.mxu0 %v551
        %v579 = vpop.f32.mrf.mxu0
        %v580 = vadd.f32 %v533, %v579
        %581 = vmatmul.f32.gmra.mxu0 %v554
        %v582 = vpop.f32.mrf.mxu0
        %v583 = vadd.f32 %v538, %v582
        %584 = vmatmul.f32.gmra.mxu0 %v557
        %v585 = vpop.f32.mrf.mxu0
        %v586 = vadd.f32 %v543, %v585
        %587 = vmatmul.f32.gmra.mxu0 %v560
        %v588 = vpop.f32.mrf.mxu0
        %v589 = vadd.f32 %v548, %v588
        %590 = vdwg.mxu0
        %591 = vmatpush.msra.mxu0 0.0
        %592 = vmatpush.msra.mxu0 0.0
        %593 = vmatpush.msra.mxu0 0.0
        %594 = vmatpush.msra.mxu0 0.0
        %595 = vmatpush.msra.mxu0 0.0
        %596 = vmatpush.msra.mxu0 0.0
        %597 = vmatpush.msra.mxu0 0.0
        %598 = vmatpush.msra.mxu0 0.0
        %599 = vmatpush.msra.mxu0 0.0
        %600 = vmatpush.msra.mxu0 0.0
        %601 = vmatpush.msra.mxu0 0.0
        %602 = vmatpush.msra.mxu0 0.0
        %603 = vmatpush.msra.mxu0 %v414
        %604 = vmatpush.msra.mxu0 %v412
        %605 = vmatpush.msra.mxu0 %v410
        %606 = vmatpush.msra.mxu0 %v408
        %607 = vmatmul.f32.gmra.mxu0 %v551
        %v608 = vpop.f32.mrf.mxu0
        %v609 = vadd.f32 %v533, %v608
        %610 = vmatmul.f32.gmra.mxu0 %v554
        %v611 = vpop.f32.mrf.mxu0
        %v612 = vadd.f32 %v538, %v611
        %613 = vmatmul.f32.gmra.mxu0 %v557
        %v614 = vpop.f32.mrf.mxu0
        %v615 = vadd.f32 %v543, %v614
        %616 = vmatmul.f32.gmra.mxu0 %v560
        %v617 = vpop.f32.mrf.mxu0
        %v618 = vadd.f32 %v548, %v617
        %619 = vdwg.mxu0
        %v620 = vmax.f32 %v580, 0.0
        %v621 = vmax.f32 %v609, 0.0
        %v622 = vmax.f32 %v583, 0.0
        %v623 = vmax.f32 %v612, 0.0
        %v624 = vmax.f32 %v586, 0.0
        %v625 = vmax.f32 %v615, 0.0
        %v626 = vmax.f32 %v589, 0.0
        %v627 = vmax.f32 %v618, 0.0
        %v628 = vadd.f32 %v514, %v620
        %v629 = vadd.f32 %v515, %v621
        %v630 = vadd.f32 %v516, %v622
        %v631 = vadd.f32 %v517, %v623
        %v632 = vadd.f32 %v518, %v624
        %v633 = vadd.f32 %v519, %v625
        %v634 = vadd.f32 %v520, %v626
        %v635 = vadd.f32 %v521, %v627
        %v636 = vmax.f32 %v628, 0.0
        %v637 = vmax.f32 %v629, 0.0
        %v638 = vmax.f32 %v630, 0.0
        %v639 = vmax.f32 %v631, 0.0
        %v640 = vmax.f32 %v632, 0.0
        %v641 = vmax.f32 %v633, 0.0
        %v642 = vmax.f32 %v634, 0.0
        %v643 = vmax.f32 %v635, 0.0
        %v644 = vld [vmem:[%s6] sm:$0x1]
        %v645 = vld [vmem:[#allocation2] sm:$0x1]
        %647 = vset.pattern.permute.xlu0 0
        %648 = vperm.xlu0 %647, %v645
        %v649 = vpop.permute.xlu0 %648
        %v651 = vperm.slane %v649, 0
        %v653 = vsel %vm443, %v644, 0
        %655 = vmatpush.msra.mxu0 0.0
        %656 = vmatpush.msra.mxu0 0.0
        %657 = vmatpush.msra.mxu0 0.0
        %658 = vmatpush.msra.mxu0 0.0
        %659 = vmatpush.msra.mxu0 0.0
        %660 = vmatpush.msra.mxu0 0.0
        %661 = vmatpush.msra.mxu0 0.0
        %662 = vmatpush.msra.mxu0 0.0
        %663 = vmatpush.msra.mxu0 0.0
        %664 = vmatpush.msra.mxu0 0.0
        %665 = vmatpush.msra.mxu0 0.0
        %666 = vmatpush.msra.mxu0 0.0
        %667 = vmatpush.msra.mxu0 %v642
        %668 = vmatpush.msra.mxu0 %v640
        %669 = vmatpush.msra.mxu0 %v638
        %670 = vmatpush.msra.mxu0 %v636
        %671 = vmatmul.f32.gmra.mxu0 %v653
        %v672 = vpop.f32.mrf.mxu0
        %v673 = vadd.f32 %v651, %v672
        %674 = vdwg.mxu0
        %675 = vmatpush.msra.mxu0 0.0
        %676 = vmatpush.msra.mxu0 0.0
        %677 = vmatpush.msra.mxu0 0.0
        %678 = vmatpush.msra.mxu0 0.0
        %679 = vmatpush.msra.mxu0 0.0
        %680 = vmatpush.msra.mxu0 0.0
        %681 = vmatpush.msra.mxu0 0.0
        %682 = vmatpush.msra.mxu0 0.0
        %683 = vmatpush.msra.mxu0 0.0
        %684 = vmatpush.msra.mxu0 0.0
        %685 = vmatpush.msra.mxu0 0.0
        %686 = vmatpush.msra.mxu0 0.0
        %687 = vmatpush.msra.mxu0 %v643
        %688 = vmatpush.msra.mxu0 %v641
        %689 = vmatpush.msra.mxu0 %v639
        %690 = vmatpush.msra.mxu0 %v637
        %691 = vmatmul.f32.gmra.mxu0 %v653
        %v692 = vpop.f32.mrf.mxu0
        %v693 = vadd.f32 %v651, %v692
        %694 = vdwg.mxu0
        %v695 = vsub.f32 0.0, %v673
        %v696 = vsub.f32 0.0, %v693
        %v697 = vmul.f32 %v695, 1.442695
        %v698 = vpow.pop %v697
        %v699 = vmul.f32 %v696, 1.442695
        %v700 = vpow.pop %v699
        %v701 = vadd.f32 %v698, 1.0
        %v702 = vadd.f32 %v700, 1.0
        %v703 = vrcp.pop %v701
        %v704 = vrcp.pop %v702
        %v705 = vadd.f32 %v703, 1.0
        %v706 = vadd.f32 %v704, 1.0
        %v707 = vperm.slane %v705, 0
        %v708 = vperm.slane %v706, 0
        %v709 = vmul.f32 %v407, %v707
        %v710 = vmul.f32 %v408, %v708
        %v711 = vmul.f32 %v409, %v707
        %v712 = vmul.f32 %v410, %v708
        %v713 = vmul.f32 %v411, %v707
        %v714 = vmul.f32 %v412, %v708
        %v715 = vmul.f32 %v413, %v707
        %v716 = vmul.f32 %v414, %v708
        %v717 = vld [vmem:[%s8] sm:$0xff]
        %v718 = vld [vmem:[%s8 + $0x8] sm:$0xff]
        %v719 = vld [vmem:[%s8 + $0x10] sm:$0xff]
        %v720 = vld [vmem:[%s8 + $0x18] sm:$0xff]
        %v721 = vld [vmem:[%s8 + $0x20] sm:$0xff]
        %v722 = vld [vmem:[%s8 + $0x28] sm:$0xff]
        %v723 = vld [vmem:[%s8 + $0x30] sm:$0xff]
        %v724 = vld [vmem:[%s8 + $0x38] sm:$0xff]
        %vm725 = vcmask 523264
        %v727 = vsel %vm725, %v717, 0
        %v730 = vsel %vm725, %v718, 0
        %v733 = vsel %vm725, %v719, 0
        %v736 = vsel %vm725, %v720, 0
        %v739 = vsel %vm725, %v721, 0
        %v742 = vsel %vm725, %v722, 0
        %v745 = vsel %vm725, %v723, 0
        %v748 = vsel %vm725, %v724, 0
        %750 = vmatpush.msra.mxu0 0.0
        %751 = vmatpush.msra.mxu0 0.0
        %752 = vmatpush.msra.mxu0 0.0
        %753 = vmatpush.msra.mxu0 0.0
        %754 = vmatpush.msra.mxu0 0.0
        %755 = vmatpush.msra.mxu0 0.0
        %756 = vmatpush.msra.mxu0 0.0
        %757 = vmatpush.msra.mxu0 0.0
        %758 = vmatpush.msra.mxu0 %v405
        %759 = vmatpush.msra.mxu0 %v403
        %760 = vmatpush.msra.mxu0 %v401
        %761 = vmatpush.msra.mxu0 %v399
        %762 = vmatpush.msra.mxu0 %v715
        %763 = vmatpush.msra.mxu0 %v713
        %764 = vmatpush.msra.mxu0 %v711
        %765 = vmatpush.msra.mxu0 %v709
        %766 = vmatmul.f32.gmra.mxu0 %v727
        %v767 = vpop.f32.mrf.mxu0
        %v768 = vadd.f32 0.0, %v767
        %769 = vmatmul.f32.gmra.mxu0 %v730
        %v770 = vpop.f32.mrf.mxu0
        %v771 = vadd.f32 0.0, %v770
        %772 = vmatmul.f32.gmra.mxu0 %v733
        %v773 = vpop.f32.mrf.mxu0
        %v774 = vadd.f32 0.0, %v773
        %775 = vmatmul.f32.gmra.mxu0 %v736
        %v776 = vpop.f32.mrf.mxu0
        %v777 = vadd.f32 0.0, %v776
        %778 = vmatmul.f32.gmra.mxu0 %v739
        %v779 = vpop.f32.mrf.mxu0
        %v780 = vadd.f32 0.0, %v779
        %781 = vmatmul.f32.gmra.mxu0 %v742
        %v782 = vpop.f32.mrf.mxu0
        %v783 = vadd.f32 0.0, %v782
        %784 = vmatmul.f32.gmra.mxu0 %v745
        %v785 = vpop.f32.mrf.mxu0
        %v786 = vadd.f32 0.0, %v785
        %787 = vmatmul.f32.gmra.mxu0 %v748
        %v788 = vpop.f32.mrf.mxu0
        %v789 = vadd.f32 0.0, %v788
        %790 = vdwg.mxu0
        %791 = vmatpush.msra.mxu0 0.0
        %792 = vmatpush.msra.mxu0 0.0
        %793 = vmatpush.msra.mxu0 0.0
        %794 = vmatpush.msra.mxu0 0.0
        %795 = vmatpush.msra.mxu0 0.0
        %796 = vmatpush.msra.mxu0 0.0
        %797 = vmatpush.msra.mxu0 0.0
        %798 = vmatpush.msra.mxu0 0.0
        %799 = vmatpush.msra.mxu0 %v406
        %800 = vmatpush.msra.mxu0 %v404
        %801 = vmatpush.msra.mxu0 %v402
        %802 = vmatpush.msra.mxu0 %v400
        %803 = vmatpush.msra.mxu0 %v716
        %804 = vmatpush.msra.mxu0 %v714
        %805 = vmatpush.msra.mxu0 %v712
        %806 = vmatpush.msra.mxu0 %v710
        %807 = vmatmul.f32.gmra.mxu0 %v727
        %v808 = vpop.f32.mrf.mxu0
        %v809 = vadd.f32 0.0, %v808
        %810 = vmatmul.f32.gmra.mxu0 %v730
        %v811 = vpop.f32.mrf.mxu0
        %v812 = vadd.f32 0.0, %v811
        %813 = vmatmul.f32.gmra.mxu0 %v733
        %v814 = vpop.f32.mrf.mxu0
        %v815 = vadd.f32 0.0, %v814
        %816 = vmatmul.f32.gmra.mxu0 %v736
        %v817 = vpop.f32.mrf.mxu0
        %v818 = vadd.f32 0.0, %v817
        %819 = vmatmul.f32.gmra.mxu0 %v739
        %v820 = vpop.f32.mrf.mxu0
        %v821 = vadd.f32 0.0, %v820
        %822 = vmatmul.f32.gmra.mxu0 %v742
        %v823 = vpop.f32.mrf.mxu0
        %v824 = vadd.f32 0.0, %v823
        %825 = vmatmul.f32.gmra.mxu0 %v745
        %v826 = vpop.f32.mrf.mxu0
        %v827 = vadd.f32 0.0, %v826
        %828 = vmatmul.f32.gmra.mxu0 %v748
        %v829 = vpop.f32.mrf.mxu0
        %v830 = vadd.f32 0.0, %v829
        %831 = vdwg.mxu0
        %v832 = vadd.f32 %v768, %v809
        %833 = vadd.xlane.f32.xlu0 %v832
        %v834 = vpop.xlane.xlu0 %833
        %v835 = vadd.f32 %v771, %v812
        %836 = vadd.xlane.f32.xlu0 %v835
        %v837 = vpop.xlane.xlu0 %836
        %v838 = vadd.f32 %v774, %v815
        %839 = vadd.xlane.f32.xlu0 %v838
        %v840 = vpop.xlane.xlu0 %839
        %v841 = vadd.f32 %v777, %v818
        %842 = vadd.xlane.f32.xlu0 %v841
        %v843 = vpop.xlane.xlu0 %842
        %v844 = vadd.f32 %v780, %v821
        %845 = vadd.xlane.f32.xlu0 %v844
        %v846 = vpop.xlane.xlu0 %845
        %v847 = vadd.f32 %v783, %v824
        %848 = vadd.xlane.f32.xlu0 %v847
        %v849 = vpop.xlane.xlu0 %848
        %v850 = vadd.f32 %v786, %v827
        %851 = vadd.xlane.f32.xlu0 %v850
        %v852 = vpop.xlane.xlu0 %851
        %v853 = vadd.f32 %v789, %v830
        %854 = vadd.xlane.f32.xlu0 %v853
        %v855 = vpop.xlane.xlu0 %854
        %v856 = vrcp.pop 256.0
        %v857 = vmul.f32 256.0, %v856
        %v858 = vsub.f32 1.0, %v857
        %v859 = vmul.f32 %v856, %v858
        %v860 = vadd.f32 %v856, %v859
        %vm861 = vweird.f32 %v856
        %v862 = vsel %vm861, %v856, %v860
        %v863 = vmul.f32 %v834, %v862
        %v864 = vmul.f32 %v837, %v862
        %v865 = vmul.f32 %v840, %v862
        %v866 = vmul.f32 %v843, %v862
        %v867 = vmul.f32 %v846, %v862
        %v868 = vmul.f32 %v849, %v862
        %v869 = vmul.f32 %v852, %v862
        %v870 = vmul.f32 %v855, %v862
        %v871 = vsub.f32 0.0, %v863
        %v872 = vsub.f32 0.0, %v864
        %v873 = vsub.f32 0.0, %v865
        %v874 = vsub.f32 0.0, %v866
        %v875 = vsub.f32 0.0, %v867
        %v876 = vsub.f32 0.0, %v868
        %v877 = vsub.f32 0.0, %v869
        %v878 = vsub.f32 0.0, %v870
        %v879 = vmul.f32 %v871, 1.442695
        %v880 = vpow.pop %v879
        %v881 = vmul.f32 %v872, 1.442695
        %v882 = vpow.pop %v881
        %v883 = vmul.f32 %v873, 1.442695
        %v884 = vpow.pop %v883
        %v885 = vmul.f32 %v874, 1.442695
        %v886 = vpow.pop %v885
        %v887 = vmul.f32 %v875, 1.442695
        %v888 = vpow.pop %v887
        %v889 = vmul.f32 %v876, 1.442695
        %v890 = vpow.pop %v889
        %v891 = vmul.f32 %v877, 1.442695
        %v892 = vpow.pop %v891
        %v893 = vmul.f32 %v878, 1.442695
        %v894 = vpow.pop %v893
        %v895 = vadd.f32 %v880, 1.0
        %v896 = vadd.f32 %v882, 1.0
        %v897 = vadd.f32 %v884, 1.0
        %v898 = vadd.f32 %v886, 1.0
        %v899 = vadd.f32 %v888, 1.0
        %v900 = vadd.f32 %v890, 1.0
        %v901 = vadd.f32 %v892, 1.0
        %v902 = vadd.f32 %v894, 1.0
        %v903 = vrcp.pop %v895
        %v904 = vrcp.pop %v896
        %v905 = vrcp.pop %v897
        %v906 = vrcp.pop %v898
        %v907 = vrcp.pop %v899
        %v908 = vrcp.pop %v900
        %v909 = vrcp.pop %v901
        %v910 = vrcp.pop %v902
        %v911 = vmul.f32 %v709, %v903
        %v912 = vmul.f32 %v710, %v903
        %v913 = vmul.f32 %v711, %v904
        %v914 = vmul.f32 %v712, %v904
        %v915 = vmul.f32 %v713, %v905
        %v916 = vmul.f32 %v714, %v905
        %v917 = vmul.f32 %v715, %v906
        %v918 = vmul.f32 %v716, %v906
        %v919 = vmul.f32 %v399, %v907
        %v920 = vmul.f32 %v400, %v907
        %v921 = vmul.f32 %v401, %v908
        %v922 = vmul.f32 %v402, %v908
        %v923 = vmul.f32 %v403, %v909
        %v924 = vmul.f32 %v404, %v909
        %v925 = vmul.f32 %v405, %v910
        %v926 = vmul.f32 %v406, %v910
        %v927 = vadd.f32 %v911, %v913
        %v928 = vadd.f32 %v927, %v915
        %v929 = vadd.f32 %v928, %v917
        %v930 = vadd.f32 %v929, %v919
        %v931 = vadd.f32 %v930, %v921
        %v932 = vadd.f32 %v931, %v923
        %v933 = vadd.f32 %v932, %v925
        %v934 = vrot.slane %v933, 4
        %v935 = vadd.f32 %v933, %v934
        %v936 = vrot.slane %v935, 2
        %v937 = vadd.f32 %v935, %v936
        %v938 = vrot.slane %v937, 1
        %v939 = vadd.f32 %v937, %v938
        %v940 = vadd.f32 %v912, %v914
        %v941 = vadd.f32 %v940, %v916
        %v942 = vadd.f32 %v941, %v918
        %v943 = vadd.f32 %v942, %v920
        %v944 = vadd.f32 %v943, %v922
        %v945 = vadd.f32 %v944, %v924
        %v946 = vadd.f32 %v945, %v926
        %v947 = vrot.slane %v946, 4
        %v948 = vadd.f32 %v946, %v947
        %v949 = vrot.slane %v948, 2
        %v950 = vadd.f32 %v948, %v949
        %v951 = vrot.slane %v950, 1
        %v952 = vadd.f32 %v950, %v951
        %v953 = vrcp.pop 64.0
        %v954 = vmul.f32 64.0, %v953
        %v955 = vsub.f32 1.0, %v954
        %v956 = vmul.f32 %v953, %v955
        %v957 = vadd.f32 %v953, %v956
        %vm958 = vweird.f32 %v953
        %v959 = vsel %vm958, %v953, %v957
        %v960 = vmul.f32 %v939, %v959
        %v961 = vmul.f32 %v952, %v959
        %v962 = vmax.f32 %v911, %v915
        %v963 = vmax.f32 %v913, %v917
        %v964 = vmax.f32 %v962, %v919
        %v965 = vmax.f32 %v963, %v921
        %v966 = vmax.f32 %v964, %v923
        %v967 = vmax.f32 %v965, %v925
        %v968 = vmax.f32 %v966, %v967
        %v969 = vrot.slane %v968, 4
        %v970 = vmax.f32 %v968, %v969
        %v971 = vrot.slane %v970, 2
        %v972 = vmax.f32 %v970, %v971
        %v973 = vrot.slane %v972, 1
        %v974 = vmax.f32 %v972, %v973
        %v975 = vmax.f32 %v912, %v916
        %v976 = vmax.f32 %v914, %v918
        %v977 = vmax.f32 %v975, %v920
        %v978 = vmax.f32 %v976, %v922
        %v979 = vmax.f32 %v977, %v924
        %v980 = vmax.f32 %v978, %v926
        %v981 = vmax.f32 %v979, %v980
        %v982 = vrot.slane %v981, 4
        %v983 = vmax.f32 %v981, %v982
        %v984 = vrot.slane %v983, 2
        %v985 = vmax.f32 %v983, %v984
        %v986 = vrot.slane %v985, 1
        %v987 = vmax.f32 %v985, %v986
        %v988 = vld [vmem:[#allocation3] sm:$0xff]
        %v989 = vld [vmem:[#allocation3 + $0x8] sm:$0xff]
        %v990 = vld [vmem:[#allocation3 + $0x10] sm:$0xff]
        %v991 = vld [vmem:[#allocation3 + $0x18] sm:$0xff]
        %v992 = vld [vmem:[#allocation3 + $0x20] sm:$0xff]
        %v993 = vld [vmem:[#allocation3 + $0x28] sm:$0xff]
        %v994 = vld [vmem:[#allocation3 + $0x30] sm:$0xff]
        %v995 = vld [vmem:[#allocation3 + $0x38] sm:$0xff]
        %v996 = vld [vmem:[#allocation3 + $0x40] sm:$0xff]
        %v997 = vld [vmem:[#allocation3 + $0x48] sm:$0xff]
        %v998 = vld [vmem:[#allocation3 + $0x50] sm:$0xff]
        %v999 = vld [vmem:[#allocation3 + $0x58] sm:$0xff]
        %v1000 = vld [vmem:[#allocation3 + $0x60] sm:$0xff]
        %v1001 = vld [vmem:[#allocation3 + $0x68] sm:$0xff]
        %v1002 = vld [vmem:[#allocation3 + $0x70] sm:$0xff]
        %v1003 = vld [vmem:[#allocation3 + $0x78] sm:$0xff]
        %v1004 = vld [vmem:[#allocation3 + $0x80] sm:$0xff]
        %v1005 = vld [vmem:[#allocation3 + $0x88] sm:$0xff]
        %v1006 = vld [vmem:[#allocation3 + $0x90] sm:$0xff]
        %v1007 = vld [vmem:[#allocation3 + $0x98] sm:$0xff]
        %v1008 = vld [vmem:[#allocation3 + $0xa0] sm:$0xff]
        %v1009 = vld [vmem:[#allocation3 + $0xa8] sm:$0xff]
        %v1010 = vld [vmem:[#allocation3 + $0xb0] sm:$0xff]
        %v1011 = vld [vmem:[#allocation3 + $0xb8] sm:$0xff]
        %v1012 = vld [vmem:[#allocation3 + $0xc0] sm:$0xff]
        %v1013 = vld [vmem:[#allocation3 + $0xc8] sm:$0xff]
        %v1014 = vld [vmem:[#allocation3 + $0xd0] sm:$0xff]
        %v1015 = vld [vmem:[#allocation3 + $0xd8] sm:$0xff]
        %v1016 = vld [vmem:[#allocation3 + $0xe0] sm:$0xff]
        %v1017 = vld [vmem:[#allocation3 + $0xe8] sm:$0xff]
        %v1018 = vld [vmem:[#allocation3 + $0xf0] sm:$0xff]
        %v1019 = vld [vmem:[#allocation3 + $0xf8] sm:$0xff]
        %v1020 = vld [vmem:[#allocation3 + $0x100] sm:$0xff]
        %v1021 = vld [vmem:[#allocation3 + $0x108] sm:$0xff]
        %v1022 = vld [vmem:[#allocation3 + $0x110] sm:$0xff]
        %v1023 = vld [vmem:[#allocation3 + $0x118] sm:$0xff]
        %v1024 = vld [vmem:[#allocation3 + $0x120] sm:$0xff]
        %v1025 = vld [vmem:[#allocation3 + $0x128] sm:$0xff]
        %v1026 = vld [vmem:[#allocation3 + $0x130] sm:$0xff]
        %v1027 = vld [vmem:[#allocation3 + $0x138] sm:$0xff]
        %v1028 = vld [vmem:[#allocation3 + $0x140] sm:$0xff]
        %v1029 = vld [vmem:[#allocation3 + $0x148] sm:$0xff]
        %v1030 = vld [vmem:[#allocation3 + $0x150] sm:$0xff]
        %v1031 = vld [vmem:[#allocation3 + $0x158] sm:$0xff]
        %v1032 = vld [vmem:[#allocation3 + $0x160] sm:$0xff]
        %v1033 = vld [vmem:[#allocation3 + $0x168] sm:$0xff]
        %v1034 = vld [vmem:[#allocation3 + $0x170] sm:$0xff]
        %v1035 = vld [vmem:[#allocation3 + $0x178] sm:$0xff]
        %v1036 = vld [vmem:[#allocation3 + $0x180] sm:$0xff]
        %v1037 = vld [vmem:[#allocation3 + $0x188] sm:$0xff]
        %v1038 = vld [vmem:[#allocation3 + $0x190] sm:$0xff]
        %v1039 = vld [vmem:[#allocation3 + $0x198] sm:$0xff]
        %v1040 = vld [vmem:[#allocation3 + $0x1a0] sm:$0xff]
        %v1041 = vld [vmem:[#allocation3 + $0x1a8] sm:$0xff]
        %v1042 = vld [vmem:[#allocation3 + $0x1b0] sm:$0xff]
        %v1043 = vld [vmem:[#allocation3 + $0x1b8] sm:$0xff]
        %v1044 = vld [vmem:[#allocation3 + $0x1c0] sm:$0xff]
        %v1045 = vld [vmem:[#allocation3 + $0x1c8] sm:$0xff]
        %v1046 = vld [vmem:[#allocation3 + $0x1d0] sm:$0xff]
        %v1047 = vld [vmem:[#allocation3 + $0x1d8] sm:$0xff]
        %v1048 = vld [vmem:[#allocation3 + $0x1e0] sm:$0xff]
        %v1049 = vld [vmem:[#allocation3 + $0x1e8] sm:$0xff]
        %v1050 = vld [vmem:[#allocation3 + $0x1f0] sm:$0xff]
        %v1051 = vld [vmem:[#allocation3 + $0x1f8] sm:$0xff]
        %v1052 = vld [vmem:[#allocation3 + $0x200] sm:$0xff]
        %v1053 = vld [vmem:[#allocation3 + $0x208] sm:$0xff]
        %v1054 = vld [vmem:[#allocation3 + $0x210] sm:$0xff]
        %v1055 = vld [vmem:[#allocation3 + $0x218] sm:$0xff]
        %v1056 = vld [vmem:[#allocation3 + $0x220] sm:$0xff]
        %v1057 = vld [vmem:[#allocation3 + $0x228] sm:$0xff]
        %v1058 = vld [vmem:[#allocation3 + $0x230] sm:$0xff]
        %v1059 = vld [vmem:[#allocation3 + $0x238] sm:$0xff]
        %v1060 = vld [vmem:[#allocation3 + $0x240] sm:$0xff]
        %v1061 = vld [vmem:[#allocation3 + $0x248] sm:$0xff]
        %v1062 = vld [vmem:[#allocation3 + $0x250] sm:$0xff]
        %v1063 = vld [vmem:[#allocation3 + $0x258] sm:$0xff]
        %v1064 = vld [vmem:[#allocation3 + $0x260] sm:$0xff]
        %v1065 = vld [vmem:[#allocation3 + $0x268] sm:$0xff]
        %v1066 = vld [vmem:[#allocation3 + $0x270] sm:$0xff]
        %v1067 = vld [vmem:[#allocation3 + $0x278] sm:$0xff]
        %v1068 = vld [vmem:[#allocation3 + $0x280] sm:$0xff]
        %v1069 = vld [vmem:[#allocation3 + $0x288] sm:$0xff]
        %v1070 = vld [vmem:[#allocation3 + $0x290] sm:$0xff]
        %v1071 = vld [vmem:[#allocation3 + $0x298] sm:$0xff]
        %v1072 = vld [vmem:[#allocation3 + $0x2a0] sm:$0xff]
        %v1073 = vld [vmem:[#allocation3 + $0x2a8] sm:$0xff]
        %v1074 = vld [vmem:[#allocation3 + $0x2b0] sm:$0xff]
        %v1075 = vld [vmem:[#allocation3 + $0x2b8] sm:$0xff]
        %v1076 = vld [vmem:[#allocation3 + $0x2c0] sm:$0xff]
        %v1077 = vld [vmem:[#allocation3 + $0x2c8] sm:$0xff]
        %v1078 = vld [vmem:[#allocation3 + $0x2d0] sm:$0xff]
        %v1079 = vld [vmem:[#allocation3 + $0x2d8] sm:$0xff]
        %v1080 = vld [vmem:[#allocation3 + $0x2e0] sm:$0xff]
        %v1081 = vld [vmem:[#allocation3 + $0x2e8] sm:$0xff]
        %v1082 = vld [vmem:[#allocation3 + $0x2f0] sm:$0xff]
        %v1083 = vld [vmem:[#allocation3 + $0x2f8] sm:$0xff]
        %v1084 = vld [vmem:[#allocation3 + $0x300] sm:$0xff]
        %v1085 = vld [vmem:[#allocation3 + $0x308] sm:$0xff]
        %v1086 = vld [vmem:[#allocation3 + $0x310] sm:$0xff]
        %v1087 = vld [vmem:[#allocation3 + $0x318] sm:$0xff]
        %v1088 = vld [vmem:[#allocation3 + $0x320] sm:$0xff]
        %v1089 = vld [vmem:[#allocation3 + $0x328] sm:$0xff]
        %v1090 = vld [vmem:[#allocation3 + $0x330] sm:$0xff]
        %v1091 = vld [vmem:[#allocation3 + $0x338] sm:$0xff]
        %v1092 = vld [vmem:[#allocation3 + $0x340] sm:$0xff]
        %v1093 = vld [vmem:[#allocation3 + $0x348] sm:$0xff]
        %v1094 = vld [vmem:[#allocation3 + $0x350] sm:$0xff]
        %v1095 = vld [vmem:[#allocation3 + $0x358] sm:$0xff]
        %v1096 = vld [vmem:[#allocation3 + $0x360] sm:$0xff]
        %v1097 = vld [vmem:[#allocation3 + $0x368] sm:$0xff]
        %v1098 = vld [vmem:[#allocation3 + $0x370] sm:$0xff]
        %v1099 = vld [vmem:[#allocation3 + $0x378] sm:$0xff]
        %v1100 = vld [vmem:[#allocation3 + $0x380] sm:$0xff]
        %v1101 = vld [vmem:[#allocation3 + $0x388] sm:$0xff]
        %v1102 = vld [vmem:[#allocation3 + $0x390] sm:$0xff]
        %v1103 = vld [vmem:[#allocation3 + $0x398] sm:$0xff]
        %v1104 = vld [vmem:[#allocation3 + $0x3a0] sm:$0xff]
        %v1105 = vld [vmem:[#allocation3 + $0x3a8] sm:$0xff]
        %v1106 = vld [vmem:[#allocation3 + $0x3b0] sm:$0xff]
        %v1107 = vld [vmem:[#allocation3 + $0x3b8] sm:$0xff]
        %v1108 = vld [vmem:[#allocation3 + $0x3c0] sm:$0xff]
        %v1109 = vld [vmem:[#allocation3 + $0x3c8] sm:$0xff]
        %v1110 = vld [vmem:[#allocation3 + $0x3d0] sm:$0xff]
        %v1111 = vld [vmem:[#allocation3 + $0x3d8] sm:$0xff]
        %v1112 = vld [vmem:[#allocation3 + $0x3e0] sm:$0xff]
        %v1113 = vld [vmem:[#allocation3 + $0x3e8] sm:$0xff]
        %v1114 = vld [vmem:[#allocation3 + $0x3f0] sm:$0xff]
        %v1115 = vld [vmem:[#allocation3 + $0x3f8] sm:$0xff]
        %1116 = vmatpush.msra.mxu0 %v1018
        %1117 = vmatpush.msra.mxu0 %v1016
        %1118 = vmatpush.msra.mxu0 %v1014
        %1119 = vmatpush.msra.mxu0 %v1012
        %1120 = vmatpush.msra.mxu0 %v1010
        %1121 = vmatpush.msra.mxu0 %v1008
        %1122 = vmatpush.msra.mxu0 %v1006
        %1123 = vmatpush.msra.mxu0 %v1004
        %1124 = vmatpush.msra.mxu0 %v1002
        %1125 = vmatpush.msra.mxu0 %v1000
        %1126 = vmatpush.msra.mxu0 %v998
        %1127 = vmatpush.msra.mxu0 %v996
        %1128 = vmatpush.msra.mxu0 %v994
        %1129 = vmatpush.msra.mxu0 %v992
        %1130 = vmatpush.msra.mxu0 %v990
        %1131 = vmatpush.msra.mxu0 %v988
        %1132 = vmatmul.f32.gmra.mxu0 %v960
        %v1133 = vpop.f32.mrf.mxu0
        %v1134 = vadd.f32 0.0, %v1133
        %1135 = vdwg.mxu0
        %1136 = vmatpush.msra.mxu0 %v1050
        %1137 = vmatpush.msra.mxu0 %v1048
        %1138 = vmatpush.msra.mxu0 %v1046
        %1139 = vmatpush.msra.mxu0 %v1044
        %1140 = vmatpush.msra.mxu0 %v1042
        %1141 = vmatpush.msra.mxu0 %v1040
        %1142 = vmatpush.msra.mxu0 %v1038
        %1143 = vmatpush.msra.mxu0 %v1036
        %1144 = vmatpush.msra.mxu0 %v1034
        %1145 = vmatpush.msra.mxu0 %v1032
        %1146 = vmatpush.msra.mxu0 %v1030
        %1147 = vmatpush.msra.mxu0 %v1028
        %1148 = vmatpush.msra.mxu0 %v1026
        %1149 = vmatpush.msra.mxu0 %v1024
        %1150 = vmatpush.msra.mxu0 %v1022
        %1151 = vmatpush.msra.mxu0 %v1020
        %1152 = vmatmul.f32.gmra.mxu0 %v961
        %v1153 = vpop.f32.mrf.mxu0
        %v1154 = vadd.f32 %v1134, %v1153
        %1155 = vdwg.mxu0
        %1156 = vmatpush.msra.mxu0 %v1082
        %1157 = vmatpush.msra.mxu0 %v1080
        %1158 = vmatpush.msra.mxu0 %v1078
        %1159 = vmatpush.msra.mxu0 %v1076
        %1160 = vmatpush.msra.mxu0 %v1074
        %1161 = vmatpush.msra.mxu0 %v1072
        %1162 = vmatpush.msra.mxu0 %v1070
        %1163 = vmatpush.msra.mxu0 %v1068
        %1164 = vmatpush.msra.mxu0 %v1066
        %1165 = vmatpush.msra.mxu0 %v1064
        %1166 = vmatpush.msra.mxu0 %v1062
        %1167 = vmatpush.msra.mxu0 %v1060
        %1168 = vmatpush.msra.mxu0 %v1058
        %1169 = vmatpush.msra.mxu0 %v1056
        %1170 = vmatpush.msra.mxu0 %v1054
        %1171 = vmatpush.msra.mxu0 %v1052
        %1172 = vmatmul.f32.gmra.mxu0 %v974
        %v1173 = vpop.f32.mrf.mxu0
        %v1174 = vadd.f32 %v1154, %v1173
        %1175 = vdwg.mxu0
        %1176 = vmatpush.msra.mxu0 %v1114
        %1177 = vmatpush.msra.mxu0 %v1112
        %1178 = vmatpush.msra.mxu0 %v1110
        %1179 = vmatpush.msra.mxu0 %v1108
        %1180 = vmatpush.msra.mxu0 %v1106
        %1181 = vmatpush.msra.mxu0 %v1104
        %1182 = vmatpush.msra.mxu0 %v1102
        %1183 = vmatpush.msra.mxu0 %v1100
        %1184 = vmatpush.msra.mxu0 %v1098
        %1185 = vmatpush.msra.mxu0 %v1096
        %1186 = vmatpush.msra.mxu0 %v1094
        %1187 = vmatpush.msra.mxu0 %v1092
        %1188 = vmatpush.msra.mxu0 %v1090
        %1189 = vmatpush.msra.mxu0 %v1088
        %1190 = vmatpush.msra.mxu0 %v1086
        %1191 = vmatpush.msra.mxu0 %v1084
        %1192 = vmatmul.f32.gmra.mxu0 %v987
        %v1193 = vpop.f32.mrf.mxu0
        %v1194 = vadd.f32 %v1174, %v1193
        %1195 = vdwg.mxu0
        %1196 = vmatpush.msra.mxu0 %v1019
        %1197 = vmatpush.msra.mxu0 %v1017
        %1198 = vmatpush.msra.mxu0 %v1015
        %1199 = vmatpush.msra.mxu0 %v1013
        %1200 = vmatpush.msra.mxu0 %v1011
        %1201 = vmatpush.msra.mxu0 %v1009
        %1202 = vmatpush.msra.mxu0 %v1007
        %1203 = vmatpush.msra.mxu0 %v1005
        %1204 = vmatpush.msra.mxu0 %v1003
        %1205 = vmatpush.msra.mxu0 %v1001
        %1206 = vmatpush.msra.mxu0 %v999
        %1207 = vmatpush.msra.mxu0 %v997
        %1208 = vmatpush.msra.mxu0 %v995
        %1209 = vmatpush.msra.mxu0 %v993
        %1210 = vmatpush.msra.mxu0 %v991
        %1211 = vmatpush.msra.mxu0 %v989
        %1212 = vmatmul.f32.gmra.mxu0 %v960
        %v1213 = vpop.f32.mrf.mxu0
        %v1214 = vadd.f32 0.0, %v1213
        %1215 = vdwg.mxu0
        %1216 = vmatpush.msra.mxu0 %v1051
        %1217 = vmatpush.msra.mxu0 %v1049
        %1218 = vmatpush.msra.mxu0 %v1047
        %1219 = vmatpush.msra.mxu0 %v1045
        %1220 = vmatpush.msra.mxu0 %v1043
        %1221 = vmatpush.msra.mxu0 %v1041
        %1222 = vmatpush.msra.mxu0 %v1039
        %1223 = vmatpush.msra.mxu0 %v1037
        %1224 = vmatpush.msra.mxu0 %v1035
        %1225 = vmatpush.msra.mxu0 %v1033
        %1226 = vmatpush.msra.mxu0 %v1031
        %1227 = vmatpush.msra.mxu0 %v1029
        %1228 = vmatpush.msra.mxu0 %v1027
        %1229 = vmatpush.msra.mxu0 %v1025
        %1230 = vmatpush.msra.mxu0 %v1023
        %1231 = vmatpush.msra.mxu0 %v1021
        %1232 = vmatmul.f32.gmra.mxu0 %v961
        %v1233 = vpop.f32.mrf.mxu0
        %v1234 = vadd.f32 %v1214, %v1233
        %1235 = vdwg.mxu0
        %1236 = vmatpush.msra.mxu0 %v1083
        %1237 = vmatpush.msra.mxu0 %v1081
        %1238 = vmatpush.msra.mxu0 %v1079
        %1239 = vmatpush.msra.mxu0 %v1077
        %1240 = vmatpush.msra.mxu0 %v1075
        %1241 = vmatpush.msra.mxu0 %v1073
        %1242 = vmatpush.msra.mxu0 %v1071
        %1243 = vmatpush.msra.mxu0 %v1069
        %1244 = vmatpush.msra.mxu0 %v1067
        %1245 = vmatpush.msra.mxu0 %v1065
        %1246 = vmatpush.msra.mxu0 %v1063
        %1247 = vmatpush.msra.mxu0 %v1061
        %1248 = vmatpush.msra.mxu0 %v1059
        %1249 = vmatpush.msra.mxu0 %v1057
        %1250 = vmatpush.msra.mxu0 %v1055
        %1251 = vmatpush.msra.mxu0 %v1053
        %1252 = vmatmul.f32.gmra.mxu0 %v974
        %v1253 = vpop.f32.mrf.mxu0
        %v1254 = vadd.f32 %v1234, %v1253
        %1255 = vdwg.mxu0
        %1256 = vmatpush.msra.mxu0 %v1115
        %1257 = vmatpush.msra.mxu0 %v1113
        %1258 = vmatpush.msra.mxu0 %v1111
        %1259 = vmatpush.msra.mxu0 %v1109
        %1260 = vmatpush.msra.mxu0 %v1107
        %1261 = vmatpush.msra.mxu0 %v1105
        %1262 = vmatpush.msra.mxu0 %v1103
        %1263 = vmatpush.msra.mxu0 %v1101
        %1264 = vmatpush.msra.mxu0 %v1099
        %1265 = vmatpush.msra.mxu0 %v1097
        %1266 = vmatpush.msra.mxu0 %v1095
        %1267 = vmatpush.msra.mxu0 %v1093
        %1268 = vmatpush.msra.mxu0 %v1091
        %1269 = vmatpush.msra.mxu0 %v1089
        %1270 = vmatpush.msra.mxu0 %v1087
        %1271 = vmatpush.msra.mxu0 %v1085
        %1272 = vmatmul.f32.gmra.mxu0 %v987
        %v1273 = vpop.f32.mrf.mxu0
        %v1274 = vadd.f32 %v1254, %v1273
        %1275 = vdwg.mxu0
        %v1276 = vsub.f32 0.0, %v1194
        %v1277 = vsub.f32 0.0, %v1274
        %v1278 = vmul.f32 %v1276, 1.442695
        %v1279 = vpow.pop %v1278
        %v1280 = vmul.f32 %v1277, 1.442695
        %v1281 = vpow.pop %v1280
        %v1282 = vadd.f32 %v1279, 1.0
        %v1283 = vadd.f32 %v1281, 1.0
        %v1284 = vrcp.pop %v1282
        %v1285 = vrcp.pop %v1283
        %v1286 = vperm.slane %v1284, 0
        %v1287 = vperm.slane %v1285, 0
        %v1288 = vmul.f32 %v911, %v1286
        %v1289 = vmul.f32 %v912, %v1287
        %v1290 = vmul.f32 %v913, %v1286
        %v1291 = vmul.f32 %v914, %v1287
        %v1292 = vmul.f32 %v915, %v1286
        %v1293 = vmul.f32 %v916, %v1287
        %v1294 = vmul.f32 %v917, %v1286
        %v1295 = vmul.f32 %v918, %v1287
        %v1296 = vmul.f32 %v919, %v1286
        %v1297 = vmul.f32 %v920, %v1287
        %v1298 = vmul.f32 %v921, %v1286
        %v1299 = vmul.f32 %v922, %v1287
        %v1300 = vmul.f32 %v923, %v1286
        %v1301 = vmul.f32 %v924, %v1287
        %v1302 = vmul.f32 %v925, %v1286
        %v1303 = vmul.f32 %v926, %v1287
        %1304 = vst [vmem:[%s398] sm:$0xff] %v1288
        %1305 = vst [vmem:[%s398 + $0x8] sm:$0xff] %v1289
        %1306 = vst [vmem:[%s398 + $0x10] sm:$0xff] %v1290
        %1307 = vst [vmem:[%s398 + $0x18] sm:$0xff] %v1291
        %1308 = vst [vmem:[%s398 + $0x20] sm:$0xff] %v1292
        %1309 = vst [vmem:[%s398 + $0x28] sm:$0xff] %v1293
        %1310 = vst [vmem:[%s398 + $0x30] sm:$0xff] %v1294
        %1311 = vst [vmem:[%s398 + $0x38] sm:$0xff] %v1295
        %1312 = vst [vmem:[%s398 + $0x40] sm:$0xff] %v1296
        %1313 = vst [vmem:[%s398 + $0x48] sm:$0xff] %v1297
        %1314 = vst [vmem:[%s398 + $0x50] sm:$0xff] %v1298
        %1315 = vst [vmem:[%s398 + $0x58] sm:$0xff] %v1299
        %1316 = vst [vmem:[%s398 + $0x60] sm:$0xff] %v1300
        %1317 = vst [vmem:[%s398 + $0x68] sm:$0xff] %v1301
        %1318 = vst [vmem:[%s398 + $0x70] sm:$0xff] %v1302
        %1319 = vst [vmem:[%s398 + $0x78] sm:$0xff] %v1303
        %p1320 = scmp.lt.s32.totalorder %s24, 1
        %s1321 = scalar_select %p1320, %s24, 1
        %s1322 = smul.addr %s1321, 16
        %s1323 = smul.addr %s1322, 8
        %s1324 = scalar_lea.vmem %s10, %s1323
        // Predicated region
        $region65: #{eff_forward.1} parent=59 // pred_check
          %p1325 = pneg %p262
        $region66: #{eff_forward.1} parent=59 // pred_check_branch
          %1327 = sbr.rel (%p1325) target = $region68
        $region67: #{eff_forward.1} parent=59 // pred_region
          _
        $region68: #{eff_forward.1} parent=59 // pred_fallthru
          _
      $region60: #{eff_forward.1} parent=5 // pred_fallthru
        _
      %p1328 = scmp.le.s32.totalorder 2, %s19
      // Predicated region
      $region69: #{eff_forward.1} parent=5 // pred_check
        %p1329 = pneg %p1328
      $region70: #{eff_forward.1} parent=5 // pred_check_branch
        %1331 = sbr.rel (%p1329) target = $region72
      $region71: #{eff_forward.1} parent=5 // pred_region
        %s1332 = ssub.s32 %s19, 2
        // Predicated region
        $region73: #{eff_forward.1} parent=71 // pred_check
          %p1333 = pneg %p268
        $region74: #{eff_forward.1} parent=71 // pred_check_branch
          %1335 = sbr.rel (%p1333) target = $region76
        $region75: #{eff_forward.1} parent=71 // pred_region
          %p1336 = scmp.lt.s32.totalorder %s25, 1
          %s1337 = scalar_select %p1336, %s25, 1
          %s1338 = smul.addr %s1337, 16
          %s1339 = smul.addr %s1338, 8
          %s1340 = scalar_lea.vmem %s10, %s1339
        $region76: #{eff_forward.1} parent=71 // pred_fallthru
          _
      $region72: #{eff_forward.1} parent=5 // pred_fallthru
        _
    $region6: #{eff_forward.1} parent=1 // loop_footer
      %s23 = sadd.s32 1, %s19
    $region7: #{eff_forward.1} parent=1 // loop_footer_branch
      %18 = sbr.rel target = $region3
    $region8: #{eff_forward.1} parent=1 // loop_exit
      _
    %1341 = vsyncpa [#allocation4], 1
    %s1342 = scalar_lea.sflag [#allocation4], 1
    %1343 = vsyncpa %s1342, 1

</llo_original>
